<compile_context>
chip_gen: v7x
topology: tpu7x:2x2x1
jax: 0.10.0
libtpu: 0.0.40
codegen_flags: <defaults>
</compile_context>

<pallas_src>
import jax
import jax.numpy as jnp
from jax.experimental import pallas as pl
from jax.experimental.pallas import tpu as pltpu

LANE_W = 1024        # lane (last-dim) width of the packed slab; multiple of 128
MAX_ROW_BLK = 512    # max rows per grid step -> 512*1024*4 B = 2 MiB input block


def _round_up(a: int, b: int) -> int:
    return -(-a // b) * b


def _abs_partial_kernel(x_ref, o_ref):
    """Fold a (ROW_BLK, LANE_W) tile into an (8, LANE_W) |x| partial.

    Uses static, sublane-aligned (8, LANE_W) slab slices and plain VPU adds:
    no per-step cross-lane reduce, no carried scalar accumulator.
    """
    n_slabs = x_ref.shape[0] // 8
    acc = jnp.abs(x_ref[0:8, :])
    for r in range(1, n_slabs):                      # static unrolled slab adds
        acc = acc + jnp.abs(x_ref[r * 8:(r + 1) * 8, :])
    o_ref[...] = acc


def l1_regularization(params, beta=0.01):
    """Pallas implementation of L1Regularization.forward(model)."""
    if not params:
        return jnp.float32(0.0)

    # Flatten + cast to f32 (handles any param rank, incl. 0-d).
    # TODO(synk): sub-32-bit params are upcast to f32 before the kernel; a
    # bf16-native path (16/32-row sublane tiles on v6e/v7x) would halve HBM
    # bytes for bf16 models but is unnecessary for this f32 test.
    flat = [p.reshape(-1).astype(jnp.float32) for p in params]
    n = sum(int(f.shape[0]) for f in flat)
    if n == 0:
        return jnp.float32(0.0)

    rows_needed = _round_up(n, LANE_W) // LANE_W
    row_blk = min(MAX_ROW_BLK, _round_up(rows_needed, 8))
    rows = _round_up(rows_needed, row_blk)
    n_pad = rows * LANE_W - n
    if n_pad:
        # Zero tail-padding is exact for an L1 sum (|0| = 0).
        flat.append(jnp.zeros((n_pad,), jnp.float32))
    x2d = jnp.concatenate(flat).reshape(rows, LANE_W)

    grid = rows // row_blk
    partials = pl.pallas_call(
        _abs_partial_kernel,
        out_shape=jax.ShapeDtypeStruct((grid * 8, LANE_W), jnp.float32),
        grid_spec=pltpu.PrefetchScalarGridSpec(
            num_scalar_prefetch=0,
            grid=(grid,),
            in_specs=[pl.BlockSpec((row_blk, LANE_W), lambda i: (i, 0))],
            out_specs=pl.BlockSpec((8, LANE_W), lambda i: (i, 0)),
        ),
        compiler_params=pltpu.CompilerParams(
            dimension_semantics=("parallel",)),
    )(x2d)

    # Tiny final reduction (grid*8*1024 f32 values) done outside the kernel.
    return beta * jnp.sum(partials)


def l1_regularization_ref(params, beta=0.01):
    """Pure-JAX reference (mirrors the PyTorch module)."""
    total = jnp.float32(0.0)
    for p in params:
        total = total + jnp.sum(jnp.abs(p.astype(jnp.float32)))
    return beta * total


if __name__ == "__main__":
    key = jax.random.PRNGKey(0)
    k = jax.random.split(key, 7)

    # Deterministic synthetic "model parameters" (encoder-ish shapes).
    params = [
        jax.random.normal(k[0], (32, 16), dtype=jnp.float32),      # linear1 weight
        jax.random.normal(k[1], (16,), dtype=jnp.float32),         # linear1 bias
        jax.random.normal(k[2], (16, 8), dtype=jnp.float32),       # linear2 weight
        jax.random.normal(k[3], (8,), dtype=jnp.float32),          # linear2 bias
        jax.random.normal(k[4], (4, 4, 3, 3), dtype=jnp.float32),  # conv weight (OIHW)
        jax.random.normal(k[5], (4,), dtype=jnp.float32),          # conv bias
        jax.random.normal(k[6], (1024, 768), dtype=jnp.float32),   # embedding-ish (exercises grid > 1)
    ]

    beta = 0.01
    loss = l1_regularization(params, beta=beta)
    loss = jax.block_until_ready(loss)

    loss_ref = l1_regularization_ref(params, beta=beta)
    assert jnp.isfinite(loss) and loss > 0.0, loss
    assert jnp.allclose(loss, loss_ref, rtol=1e-4, atol=1e-4), (loss, loss_ref)

    print("KERNEL_OK")
</pallas_src>

<mosaic_0001>
module attributes {stable_mosaic.version = 11 : i64} {
  func.func @_abs_partial_kernel(%arg0: i32, %arg1: memref<512x1024xf32, #tpu.memory_space<vmem>>, %arg2: memref<8x1024xf32, #tpu.memory_space<vmem>>) attributes {dimension_semantics = [#tpu.dimension_semantics<parallel>], iteration_bounds = array<i64: 2>, scalar_prefetch = 0 : i64, scratch_operands = 0 : i64, tpu.core_type = #tpu.core_type<tc>, window_params = [{transform_indices = @transform_0, window_bounds = array<i64: 512, 1024>}, {transform_indices = @transform_1, window_bounds = array<i64: 8, 1024>}]} {
    %c0 = arith.constant 0 : index
    %c0_0 = arith.constant 0 : index
    %0 = vector.load %arg1[%c0, %c0_0] : memref<512x1024xf32, #tpu.memory_space<vmem>>, vector<8x1024xf32>
    %1 = math.absf %0 : vector<8x1024xf32>
    %c8 = arith.constant 8 : index
    %c0_1 = arith.constant 0 : index
    %2 = vector.load %arg1[%c8, %c0_1] : memref<512x1024xf32, #tpu.memory_space<vmem>>, vector<8x1024xf32>
    %3 = math.absf %2 : vector<8x1024xf32>
    %4 = arith.addf %1, %3 : vector<8x1024xf32>
    %c16 = arith.constant 16 : index
    %c0_2 = arith.constant 0 : index
    %5 = vector.load %arg1[%c16, %c0_2] : memref<512x1024xf32, #tpu.memory_space<vmem>>, vector<8x1024xf32>
    %6 = math.absf %5 : vector<8x1024xf32>
    %7 = arith.addf %4, %6 : vector<8x1024xf32>
    %c24 = arith.constant 24 : index
    %c0_3 = arith.constant 0 : index
    %8 = vector.load %arg1[%c24, %c0_3] : memref<512x1024xf32, #tpu.memory_space<vmem>>, vector<8x1024xf32>
    %9 = math.absf %8 : vector<8x1024xf32>
    %10 = arith.addf %7, %9 : vector<8x1024xf32>
    %c32 = arith.constant 32 : index
    %c0_4 = arith.constant 0 : index
    %11 = vector.load %arg1[%c32, %c0_4] : memref<512x1024xf32, #tpu.memory_space<vmem>>, vector<8x1024xf32>
    %12 = math.absf %11 : vector<8x1024xf32>
    %13 = arith.addf %10, %12 : vector<8x1024xf32>
    %c40 = arith.constant 40 : index
    %c0_5 = arith.constant 0 : index
    %14 = vector.load %arg1[%c40, %c0_5] : memref<512x1024xf32, #tpu.memory_space<vmem>>, vector<8x1024xf32>
    %15 = math.absf %14 : vector<8x1024xf32>
    %16 = arith.addf %13, %15 : vector<8x1024xf32>
    %c48 = arith.constant 48 : index
    %c0_6 = arith.constant 0 : index
    %17 = vector.load %arg1[%c48, %c0_6] : memref<512x1024xf32, #tpu.memory_space<vmem>>, vector<8x1024xf32>
    %18 = math.absf %17 : vector<8x1024xf32>
    %19 = arith.addf %16, %18 : vector<8x1024xf32>
    %c56 = arith.constant 56 : index
    %c0_7 = arith.constant 0 : index
    %20 = vector.load %arg1[%c56, %c0_7] : memref<512x1024xf32, #tpu.memory_space<vmem>>, vector<8x1024xf32>
    %21 = math.absf %20 : vector<8x1024xf32>
    %22 = arith.addf %19, %21 : vector<8x1024xf32>
    %c64 = arith.constant 64 : index
    %c0_8 = arith.constant 0 : index
    %23 = vector.load %arg1[%c64, %c0_8] : memref<512x1024xf32, #tpu.memory_space<vmem>>, vector<8x1024xf32>
    %24 = math.absf %23 : vector<8x1024xf32>
    %25 = arith.addf %22, %24 : vector<8x1024xf32>
    %c72 = arith.constant 72 : index
    %c0_9 = arith.constant 0 : index
    %26 = vector.load %arg1[%c72, %c0_9] : memref<512x1024xf32, #tpu.memory_space<vmem>>, vector<8x1024xf32>
    %27 = math.absf %26 : vector<8x1024xf32>
    %28 = arith.addf %25, %27 : vector<8x1024xf32>
    %c80 = arith.constant 80 : index
    %c0_10 = arith.constant 0 : index
    %29 = vector.load %arg1[%c80, %c0_10] : memref<512x1024xf32, #tpu.memory_space<vmem>>, vector<8x1024xf32>
    %30 = math.absf %29 : vector<8x1024xf32>
    %31 = arith.addf %28, %30 : vector<8x1024xf32>
    %c88 = arith.constant 88 : index
    %c0_11 = arith.constant 0 : index
    %32 = vector.load %arg1[%c88, %c0_11] : memref<512x1024xf32, #tpu.memory_space<vmem>>, vector<8x1024xf32>
    %33 = math.absf %32 : vector<8x1024xf32>
    %34 = arith.addf %31, %33 : vector<8x1024xf32>
    %c96 = arith.constant 96 : index
    %c0_12 = arith.constant 0 : index
    %35 = vector.load %arg1[%c96, %c0_12] : memref<512x1024xf32, #tpu.memory_space<vmem>>, vector<8x1024xf32>
    %36 = math.absf %35 : vector<8x1024xf32>
    %37 = arith.addf %34, %36 : vector<8x1024xf32>
    %c104 = arith.constant 104 : index
    %c0_13 = arith.constant 0 : index
    %38 = vector.load %arg1[%c104, %c0_13] : memref<512x1024xf32, #tpu.memory_space<vmem>>, vector<8x1024xf32>
    %39 = math.absf %38 : vector<8x1024xf32>
    %40 = arith.addf %37, %39 : vector<8x1024xf32>
    %c112 = arith.constant 112 : index
    %c0_14 = arith.constant 0 : index
    %41 = vector.load %arg1[%c112, %c0_14] : memref<512x1024xf32, #tpu.memory_space<vmem>>, vector<8x1024xf32>
    %42 = math.absf %41 : vector<8x1024xf32>
    %43 = arith.addf %40, %42 : vector<8x1024xf32>
    %c120 = arith.constant 120 : index
    %c0_15 = arith.constant 0 : index
    %44 = vector.load %arg1[%c120, %c0_15] : memref<512x1024xf32, #tpu.memory_space<vmem>>, vector<8x1024xf32>
    %45 = math.absf %44 : vector<8x1024xf32>
    %46 = arith.addf %43, %45 : vector<8x1024xf32>
    %c128 = arith.constant 128 : index
    %c0_16 = arith.constant 0 : index
    %47 = vector.load %arg1[%c128, %c0_16] : memref<512x1024xf32, #tpu.memory_space<vmem>>, vector<8x1024xf32>
    %48 = math.absf %47 : vector<8x1024xf32>
    %49 = arith.addf %46, %48 : vector<8x1024xf32>
    %c136 = arith.constant 136 : index
    %c0_17 = arith.constant 0 : index
    %50 = vector.load %arg1[%c136, %c0_17] : memref<512x1024xf32, #tpu.memory_space<vmem>>, vector<8x1024xf32>
    %51 = math.absf %50 : vector<8x1024xf32>
    %52 = arith.addf %49, %51 : vector<8x1024xf32>
    %c144 = arith.constant 144 : index
    %c0_18 = arith.constant 0 : index
    %53 = vector.load %arg1[%c144, %c0_18] : memref<512x1024xf32, #tpu.memory_space<vmem>>, vector<8x1024xf32>
    %54 = math.absf %53 : vector<8x1024xf32>
    %55 = arith.addf %52, %54 : vector<8x1024xf32>
    %c152 = arith.constant 152 : index
    %c0_19 = arith.constant 0 : index
    %56 = vector.load %arg1[%c152, %c0_19] : memref<512x1024xf32, #tpu.memory_space<vmem>>, vector<8x1024xf32>
    %57 = math.absf %56 : vector<8x1024xf32>
    %58 = arith.addf %55, %57 : vector<8x1024xf32>
    %c160 = arith.constant 160 : index
    %c0_20 = arith.constant 0 : index
    %59 = vector.load %arg1[%c160, %c0_20] : memref<512x1024xf32, #tpu.memory_space<vmem>>, vector<8x1024xf32>
    %60 = math.absf %59 : vector<8x1024xf32>
    %61 = arith.addf %58, %60 : vector<8x1024xf32>
    %c168 = arith.constant 168 : index
    %c0_21 = arith.constant 0 : index
    %62 = vector.load %arg1[%c168, %c0_21] : memref<512x1024xf32, #tpu.memory_space<vmem>>, vector<8x1024xf32>
    %63 = math.absf %62 : vector<8x1024xf32>
    %64 = arith.addf %61, %63 : vector<8x1024xf32>
    %c176 = arith.constant 176 : index
    %c0_22 = arith.constant 0 : index
    %65 = vector.load %arg1[%c176, %c0_22] : memref<512x1024xf32, #tpu.memory_space<vmem>>, vector<8x1024xf32>
    %66 = math.absf %65 : vector<8x1024xf32>
    %67 = arith.addf %64, %66 : vector<8x1024xf32>
    %c184 = arith.constant 184 : index
    %c0_23 = arith.constant 0 : index
    %68 = vector.load %arg1[%c184, %c0_23] : memref<512x1024xf32, #tpu.memory_space<vmem>>, vector<8x1024xf32>
    %69 = math.absf %68 : vector<8x1024xf32>
    %70 = arith.addf %67, %69 : vector<8x1024xf32>
    %c192 = arith.constant 192 : index
    %c0_24 = arith.constant 0 : index
    %71 = vector.load %arg1[%c192, %c0_24] : memref<512x1024xf32, #tpu.memory_space<vmem>>, vector<8x1024xf32>
    %72 = math.absf %71 : vector<8x1024xf32>
    %73 = arith.addf %70, %72 : vector<8x1024xf32>
    %c200 = arith.constant 200 : index
    %c0_25 = arith.constant 0 : index
    %74 = vector.load %arg1[%c200, %c0_25] : memref<512x1024xf32, #tpu.memory_space<vmem>>, vector<8x1024xf32>
    %75 = math.absf %74 : vector<8x1024xf32>
    %76 = arith.addf %73, %75 : vector<8x1024xf32>
    %c208 = arith.constant 208 : index
    %c0_26 = arith.constant 0 : index
    %77 = vector.load %arg1[%c208, %c0_26] : memref<512x1024xf32, #tpu.memory_space<vmem>>, vector<8x1024xf32>
    %78 = math.absf %77 : vector<8x1024xf32>
    %79 = arith.addf %76, %78 : vector<8x1024xf32>
    %c216 = arith.constant 216 : index
    %c0_27 = arith.constant 0 : index
    %80 = vector.load %arg1[%c216, %c0_27] : memref<512x1024xf32, #tpu.memory_space<vmem>>, vector<8x1024xf32>
    %81 = math.absf %80 : vector<8x1024xf32>
    %82 = arith.addf %79, %81 : vector<8x1024xf32>
    %c224 = arith.constant 224 : index
    %c0_28 = arith.constant 0 : index
    %83 = vector.load %arg1[%c224, %c0_28] : memref<512x1024xf32, #tpu.memory_space<vmem>>, vector<8x1024xf32>
    %84 = math.absf %83 : vector<8x1024xf32>
    %85 = arith.addf %82, %84 : vector<8x1024xf32>
    %c232 = arith.constant 232 : index
    %c0_29 = arith.constant 0 : index
    %86 = vector.load %arg1[%c232, %c0_29] : memref<512x1024xf32, #tpu.memory_space<vmem>>, vector<8x1024xf32>
    %87 = math.absf %86 : vector<8x1024xf32>
    %88 = arith.addf %85, %87 : vector<8x1024xf32>
    %c240 = arith.constant 240 : index
    %c0_30 = arith.constant 0 : index
    %89 = vector.load %arg1[%c240, %c0_30] : memref<512x1024xf32, #tpu.memory_space<vmem>>, vector<8x1024xf32>
    %90 = math.absf %89 : vector<8x1024xf32>
    %91 = arith.addf %88, %90 : vector<8x1024xf32>
    %c248 = arith.constant 248 : index
    %c0_31 = arith.constant 0 : index
    %92 = vector.load %arg1[%c248, %c0_31] : memref<512x1024xf32, #tpu.memory_space<vmem>>, vector<8x1024xf32>
    %93 = math.absf %92 : vector<8x1024xf32>
    %94 = arith.addf %91, %93 : vector<8x1024xf32>
    %c256 = arith.constant 256 : index
    %c0_32 = arith.constant 0 : index
    %95 = vector.load %arg1[%c256, %c0_32] : memref<512x1024xf32, #tpu.memory_space<vmem>>, vector<8x1024xf32>
    %96 = math.absf %95 : vector<8x1024xf32>
    %97 = arith.addf %94, %96 : vector<8x1024xf32>
    %c264 = arith.constant 264 : index
    %c0_33 = arith.constant 0 : index
    %98 = vector.load %arg1[%c264, %c0_33] : memref<512x1024xf32, #tpu.memory_space<vmem>>, vector<8x1024xf32>
    %99 = math.absf %98 : vector<8x1024xf32>
    %100 = arith.addf %97, %99 : vector<8x1024xf32>
    %c272 = arith.constant 272 : index
    %c0_34 = arith.constant 0 : index
    %101 = vector.load %arg1[%c272, %c0_34] : memref<512x1024xf32, #tpu.memory_space<vmem>>, vector<8x1024xf32>
    %102 = math.absf %101 : vector<8x1024xf32>
    %103 = arith.addf %100, %102 : vector<8x1024xf32>
    %c280 = arith.constant 280 : index
    %c0_35 = arith.constant 0 : index
    %104 = vector.load %arg1[%c280, %c0_35] : memref<512x1024xf32, #tpu.memory_space<vmem>>, vector<8x1024xf32>
    %105 = math.absf %104 : vector<8x1024xf32>
    %106 = arith.addf %103, %105 : vector<8x1024xf32>
    %c288 = arith.constant 288 : index
    %c0_36 = arith.constant 0 : index
    %107 = vector.load %arg1[%c288, %c0_36] : memref<512x1024xf32, #tpu.memory_space<vmem>>, vector<8x1024xf32>
    %108 = math.absf %107 : vector<8x1024xf32>
    %109 = arith.addf %106, %108 : vector<8x1024xf32>
    %c296 = arith.constant 296 : index
    %c0_37 = arith.constant 0 : index
    %110 = vector.load %arg1[%c296, %c0_37] : memref<512x1024xf32, #tpu.memory_space<vmem>>, vector<8x1024xf32>
    %111 = math.absf %110 : vector<8x1024xf32>
    %112 = arith.addf %109, %111 : vector<8x1024xf32>
    %c304 = arith.constant 304 : index
    %c0_38 = arith.constant 0 : index
    %113 = vector.load %arg1[%c304, %c0_38] : memref<512x1024xf32, #tpu.memory_space<vmem>>, vector<8x1024xf32>
    %114 = math.absf %113 : vector<8x1024xf32>
    %115 = arith.addf %112, %114 : vector<8x1024xf32>
    %c312 = arith.constant 312 : index
    %c0_39 = arith.constant 0 : index
    %116 = vector.load %arg1[%c312, %c0_39] : memref<512x1024xf32, #tpu.memory_space<vmem>>, vector<8x1024xf32>
    %117 = math.absf %116 : vector<8x1024xf32>
    %118 = arith.addf %115, %117 : vector<8x1024xf32>
    %c320 = arith.constant 320 : index
    %c0_40 = arith.constant 0 : index
    %119 = vector.load %arg1[%c320, %c0_40] : memref<512x1024xf32, #tpu.memory_space<vmem>>, vector<8x1024xf32>
    %120 = math.absf %119 : vector<8x1024xf32>
    %121 = arith.addf %118, %120 : vector<8x1024xf32>
    %c328 = arith.constant 328 : index
    %c0_41 = arith.constant 0 : index
    %122 = vector.load %arg1[%c328, %c0_41] : memref<512x1024xf32, #tpu.memory_space<vmem>>, vector<8x1024xf32>
    %123 = math.absf %122 : vector<8x1024xf32>
    %124 = arith.addf %121, %123 : vector<8x1024xf32>
    %c336 = arith.constant 336 : index
    %c0_42 = arith.constant 0 : index
    %125 = vector.load %arg1[%c336, %c0_42] : memref<512x1024xf32, #tpu.memory_space<vmem>>, vector<8x1024xf32>
    %126 = math.absf %125 : vector<8x1024xf32>
    %127 = arith.addf %124, %126 : vector<8x1024xf32>
    %c344 = arith.constant 344 : index
    %c0_43 = arith.constant 0 : index
    %128 = vector.load %arg1[%c344, %c0_43] : memref<512x1024xf32, #tpu.memory_space<vmem>>, vector<8x1024xf32>
    %129 = math.absf %128 : vector<8x1024xf32>
    %130 = arith.addf %127, %129 : vector<8x1024xf32>
    %c352 = arith.constant 352 : index
    %c0_44 = arith.constant 0 : index
    %131 = vector.load %arg1[%c352, %c0_44] : memref<512x1024xf32, #tpu.memory_space<vmem>>, vector<8x1024xf32>
    %132 = math.absf %131 : vector<8x1024xf32>
    %133 = arith.addf %130, %132 : vector<8x1024xf32>
    %c360 = arith.constant 360 : index
    %c0_45 = arith.constant 0 : index
    %134 = vector.load %arg1[%c360, %c0_45] : memref<512x1024xf32, #tpu.memory_space<vmem>>, vector<8x1024xf32>
    %135 = math.absf %134 : vector<8x1024xf32>
    %136 = arith.addf %133, %135 : vector<8x1024xf32>
    %c368 = arith.constant 368 : index
    %c0_46 = arith.constant 0 : index
    %137 = vector.load %arg1[%c368, %c0_46] : memref<512x1024xf32, #tpu.memory_space<vmem>>, vector<8x1024xf32>
    %138 = math.absf %137 : vector<8x1024xf32>
    %139 = arith.addf %136, %138 : vector<8x1024xf32>
    %c376 = arith.constant 376 : index
    %c0_47 = arith.constant 0 : index
    %140 = vector.load %arg1[%c376, %c0_47] : memref<512x1024xf32, #tpu.memory_space<vmem>>, vector<8x1024xf32>
    %141 = math.absf %140 : vector<8x1024xf32>
    %142 = arith.addf %139, %141 : vector<8x1024xf32>
    %c384 = arith.constant 384 : index
    %c0_48 = arith.constant 0 : index
    %143 = vector.load %arg1[%c384, %c0_48] : memref<512x1024xf32, #tpu.memory_space<vmem>>, vector<8x1024xf32>
    %144 = math.absf %143 : vector<8x1024xf32>
    %145 = arith.addf %142, %144 : vector<8x1024xf32>
    %c392 = arith.constant 392 : index
    %c0_49 = arith.constant 0 : index
    %146 = vector.load %arg1[%c392, %c0_49] : memref<512x1024xf32, #tpu.memory_space<vmem>>, vector<8x1024xf32>
    %147 = math.absf %146 : vector<8x1024xf32>
    %148 = arith.addf %145, %147 : vector<8x1024xf32>
    %c400 = arith.constant 400 : index
    %c0_50 = arith.constant 0 : index
    %149 = vector.load %arg1[%c400, %c0_50] : memref<512x1024xf32, #tpu.memory_space<vmem>>, vector<8x1024xf32>
    %150 = math.absf %149 : vector<8x1024xf32>
    %151 = arith.addf %148, %150 : vector<8x1024xf32>
    %c408 = arith.constant 408 : index
    %c0_51 = arith.constant 0 : index
    %152 = vector.load %arg1[%c408, %c0_51] : memref<512x1024xf32, #tpu.memory_space<vmem>>, vector<8x1024xf32>
    %153 = math.absf %152 : vector<8x1024xf32>
    %154 = arith.addf %151, %153 : vector<8x1024xf32>
    %c416 = arith.constant 416 : index
    %c0_52 = arith.constant 0 : index
    %155 = vector.load %arg1[%c416, %c0_52] : memref<512x1024xf32, #tpu.memory_space<vmem>>, vector<8x1024xf32>
    %156 = math.absf %155 : vector<8x1024xf32>
    %157 = arith.addf %154, %156 : vector<8x1024xf32>
    %c424 = arith.constant 424 : index
    %c0_53 = arith.constant 0 : index
    %158 = vector.load %arg1[%c424, %c0_53] : memref<512x1024xf32, #tpu.memory_space<vmem>>, vector<8x1024xf32>
    %159 = math.absf %158 : vector<8x1024xf32>
    %160 = arith.addf %157, %159 : vector<8x1024xf32>
    %c432 = arith.constant 432 : index
    %c0_54 = arith.constant 0 : index
    %161 = vector.load %arg1[%c432, %c0_54] : memref<512x1024xf32, #tpu.memory_space<vmem>>, vector<8x1024xf32>
    %162 = math.absf %161 : vector<8x1024xf32>
    %163 = arith.addf %160, %162 : vector<8x1024xf32>
    %c440 = arith.constant 440 : index
    %c0_55 = arith.constant 0 : index
    %164 = vector.load %arg1[%c440, %c0_55] : memref<512x1024xf32, #tpu.memory_space<vmem>>, vector<8x1024xf32>
    %165 = math.absf %164 : vector<8x1024xf32>
    %166 = arith.addf %163, %165 : vector<8x1024xf32>
    %c448 = arith.constant 448 : index
    %c0_56 = arith.constant 0 : index
    %167 = vector.load %arg1[%c448, %c0_56] : memref<512x1024xf32, #tpu.memory_space<vmem>>, vector<8x1024xf32>
    %168 = math.absf %167 : vector<8x1024xf32>
    %169 = arith.addf %166, %168 : vector<8x1024xf32>
    %c456 = arith.constant 456 : index
    %c0_57 = arith.constant 0 : index
    %170 = vector.load %arg1[%c456, %c0_57] : memref<512x1024xf32, #tpu.memory_space<vmem>>, vector<8x1024xf32>
    %171 = math.absf %170 : vector<8x1024xf32>
    %172 = arith.addf %169, %171 : vector<8x1024xf32>
    %c464 = arith.constant 464 : index
    %c0_58 = arith.constant 0 : index
    %173 = vector.load %arg1[%c464, %c0_58] : memref<512x1024xf32, #tpu.memory_space<vmem>>, vector<8x1024xf32>
    %174 = math.absf %173 : vector<8x1024xf32>
    %175 = arith.addf %172, %174 : vector<8x1024xf32>
    %c472 = arith.constant 472 : index
    %c0_59 = arith.constant 0 : index
    %176 = vector.load %arg1[%c472, %c0_59] : memref<512x1024xf32, #tpu.memory_space<vmem>>, vector<8x1024xf32>
    %177 = math.absf %176 : vector<8x1024xf32>
    %178 = arith.addf %175, %177 : vector<8x1024xf32>
    %c480 = arith.constant 480 : index
    %c0_60 = arith.constant 0 : index
    %179 = vector.load %arg1[%c480, %c0_60] : memref<512x1024xf32, #tpu.memory_space<vmem>>, vector<8x1024xf32>
    %180 = math.absf %179 : vector<8x1024xf32>
    %181 = arith.addf %178, %180 : vector<8x1024xf32>
    %c488 = arith.constant 488 : index
    %c0_61 = arith.constant 0 : index
    %182 = vector.load %arg1[%c488, %c0_61] : memref<512x1024xf32, #tpu.memory_space<vmem>>, vector<8x1024xf32>
    %183 = math.absf %182 : vector<8x1024xf32>
    %184 = arith.addf %181, %183 : vector<8x1024xf32>
    %c496 = arith.constant 496 : index
    %c0_62 = arith.constant 0 : index
    %185 = vector.load %arg1[%c496, %c0_62] : memref<512x1024xf32, #tpu.memory_space<vmem>>, vector<8x1024xf32>
    %186 = math.absf %185 : vector<8x1024xf32>
    %187 = arith.addf %184, %186 : vector<8x1024xf32>
    %c504 = arith.constant 504 : index
    %c0_63 = arith.constant 0 : index
    %188 = vector.load %arg1[%c504, %c0_63] : memref<512x1024xf32, #tpu.memory_space<vmem>>, vector<8x1024xf32>
    %189 = math.absf %188 : vector<8x1024xf32>
    %190 = arith.addf %187, %189 : vector<8x1024xf32>
    %c0_64 = arith.constant 0 : index
    %c0_65 = arith.constant 0 : index
    %191 = vector.load %arg2[%c0_64, %c0_65] : memref<8x1024xf32, #tpu.memory_space<vmem>>, vector<8x1024xf32>
    tpu.vector_store %arg2[%c0_64, %c0_65], %190 {strides = array<i32>} : memref<8x1024xf32, #tpu.memory_space<vmem>>, vector<8x1024xf32>,
    return
  }
  func.func @transform_0(%arg0: i32) -> (i32, i32) {
    %c0_i32 = arith.constant 0 : i32
    %c0_i32_0 = arith.constant 0 : i32
    return %arg0, %c0_i32 : i32, i32
  }
  func.func @transform_1(%arg0: i32) -> (i32, i32) {
    %c0_i32 = arith.constant 0 : i32
    %c0_i32_0 = arith.constant 0 : i32
    return %arg0, %c0_i32 : i32, i32
  }
}

</mosaic_0001>

<llo_original>
// kernel: tpu_custom_call.1
$region0: #{tpu_custom_call.1}
  #allocation0 [shape = 'u32[]', space=smem, size = 0x4, offset = 0x4, fixed_abs, tag = 'smem constant byte address 0x4 - core index']
  #allocation1 [shape = 'u32[144,128]{1,0:T(1,128)}', space=vmem, size = 0x12000, scoped, tag = 'internal scratch']
  %s0 = inlined_call_operand.hbm [shape: f32[1024,1024], index: 0, kind: input, shape index: {}]
  %s1 = inlined_call_operand.hbm [shape: f32[16,1024], index: 1, kind: output, shape index: {}]
  %s2 = sld [smem:[#allocation0]]
  $region41: #{tpu_custom_call.1} parent=0
    _
  %s4 = ssub.s32 1, %s2
  %s5 = scalar_select 0, %s4, %s2
  $region1: #{tpu_custom_call.1} parent=0
    #allocation2 [shape = 'u8[4194304]{0}', space=vmem, size = 0x400000, scoped, tag = 'input window, operand 0']
    #allocation3 [shape = 's32[2]{0}', space=sflag, size = 0x8, scoped, tag = 'scoped memory for tpu_custom_call.1']
    #allocation4 [shape = 's32[2]{0}', space=sflag, size = 0x8, scoped, tag = 'scoped memory for tpu_custom_call.1']
    #allocation5 [shape = 'u8[65536]{0}', space=vmem, size = 0x10000, scoped, tag = 'output window, operand 0']
    %6 = vsyncpa [#allocation3], 0
    %s7 = scalar_lea.sflag [#allocation3], 1
    %8 = vsyncpa %s7, 0
    %9 = vsyncpa [#allocation4], 0
    %s10 = scalar_lea.sflag [#allocation4], 1
    %11 = vsyncpa %s10, 0
    loop: start=0, step=1, limit=4
    $region2: #{tpu_custom_call.1} parent=1 // loop_pre_header
      _
    $region3: #{tpu_custom_call.1} parent=1 // loop_header
      %s13 = sphi 0, %s17
      %p14 = scmp.ge.s32.totalorder %s13, 4
      %s23 = sphi 0, %s25
      %s26 = sphi 0, %s23
      %s27 = sphi 0, %s26
      %s43 = sphi 0, %s27
      %s49 = sphi 0, %s51
      %s52 = sphi 0, %s49
      %s53 = sphi 0, %s52
      %s69 = sphi 0, %s53
    $region4: #{tpu_custom_call.1} parent=1 // loop_header_branch
      %16 = sbr.rel (%p14) target = $region8
    $region5: #{tpu_custom_call.1} parent=1 // loop_body
      %s18 = ssub.s32 %s13, 1
      %s19 = ssub.s32 %s13, 2
      %s20 = sadd.s32 %s13, 1
      %s21 = ssub.s32 %s13, %s20
      %p22 = scmp.eq.s32.totalorder %s21, 0
      %s24 = sadd.s32 %s23, 1
      %s25 = scalar_select %p22, %s23, %s24
      %p28 = pneg %p22
      %p29 = scmp.eq.s32.totalorder %s13, 1
      %p30 = por %p28, %p29
      %p31 = scmp.ne.s32.totalorder %s23, %s26
      %p32 = scmp.eq.s32.totalorder %s13, 0
      %p33 = por %p31, %p32
      %p34 = scmp.ne.s32.totalorder %s23, %s26
      %p35 = scmp.eq.s32.totalorder %s18, 1
      %p36 = por %p34, %p35
      %p37 = scmp.ne.s32.totalorder %s26, %s27
      %p38 = scmp.eq.s32.totalorder %s18, 0
      %p39 = por %p37, %p38
      %p40 = scmp.ne.s32.totalorder %s26, %s27
      %p41 = scmp.eq.s32.totalorder %s19, 1
      %p42 = por %p40, %p41
      %p44 = scmp.ne.s32.totalorder %s27, %s43
      %p45 = scmp.eq.s32.totalorder %s19, 0
      %p46 = por %p44, %p45
      %s47 = ssub.s32 %s13, %s20
      %p48 = scmp.eq.s32.totalorder %s47, 0
      %s50 = sadd.s32 %s49, 1
      %s51 = scalar_select %p48, %s49, %s50
      %p54 = pneg %p48
      %p55 = scmp.eq.s32.totalorder %s13, 1
      %p56 = por %p54, %p55
      %p57 = scmp.ne.s32.totalorder %s49, %s52
      %p58 = scmp.eq.s32.totalorder %s13, 0
      %p59 = por %p57, %p58
      %p60 = scmp.ne.s32.totalorder %s49, %s52
      %p61 = scmp.eq.s32.totalorder %s18, 1
      %p62 = por %p60, %p61
      %p63 = scmp.ne.s32.totalorder %s52, %s53
      %p64 = scmp.eq.s32.totalorder %s18, 0
      %p65 = por %p63, %p64
      %p66 = scmp.ne.s32.totalorder %s52, %s53
      %p67 = scmp.eq.s32.totalorder %s19, 1
      %p68 = por %p66, %p67
      %p70 = scmp.ne.s32.totalorder %s53, %s69
      %p71 = scmp.eq.s32.totalorder %s19, 0
      %p72 = por %p70, %p71
      %p73 = scmp.le.s32.totalorder 1, %s13
      %p74 = scmp.lt.s32.totalorder %s13, 3
      %p75 = pnand %p73, %p74
      %p76 = pneg %p75
      // Predicated region
      $region9: #{tpu_custom_call.1} parent=5 // pred_check
        _
      $region10: #{tpu_custom_call.1} parent=5 // pred_check_branch
        %78 = sbr.rel (%p75) target = $region12
      $region11: #{tpu_custom_call.1} parent=5 // pred_region
        %s79 = ssub.s32 %s13, 1
      $region12: #{tpu_custom_call.1} parent=5 // pred_fallthru
        _
      %p80 = scmp.lt.s32.totalorder %s13, 2
      // Predicated region
      $region13: #{tpu_custom_call.1} parent=5 // pred_check
        %p81 = pneg %p80
      $region14: #{tpu_custom_call.1} parent=5 // pred_check_branch
        %83 = sbr.rel (%p81) target = $region16
      $region15: #{tpu_custom_call.1} parent=5 // pred_region
        // Predicated region
        $region17: #{tpu_custom_call.1} parent=15 // pred_check
          %p84 = pneg %p33
        $region18: #{tpu_custom_call.1} parent=15 // pred_check_branch
          %86 = sbr.rel (%p84) target = $region20
        $region19: #{tpu_custom_call.1} parent=15 // pred_region
          %s87 = sand.u32 %s23, 1
          %s88 = scalar_lea.sflag [#allocation3], %s87
          %s89 = sand.u32 %s23, 1
          %s90 = smul.addr %s89, 4096
          %s91 = scalar_lea.vmem [#allocation2], %s90
          %s92 = smul.u32 64, %s13
          %s94 = ssub.s32 65536, 65536
          %95 = vsyncadd %s88, %s94
          %s96 = smul.addr %s92, 8
          %s97 = smul.addr %s96, 128
          %s98 = scalar_lea.hbm %s0, %s97
          %s99 = sshll.u32 %s91, 4
          %s100 = int_to_ptr.vmem [resolvable:$true] %s99
          %105 = dma.hbm_to_vmem [thread:$0]  %s98, 65536, %s100, %s88, 1024, 1024, 64
        $region20: #{tpu_custom_call.1} parent=15 // pred_fallthru
          _
      $region16: #{tpu_custom_call.1} parent=5 // pred_fallthru
        _
      %p106 = scmp.le.s32.totalorder 1, %s13
      %p107 = scmp.lt.s32.totalorder %s13, 3
      %p108 = pnand %p106, %p107
      %p109 = pneg %p108
      // Predicated region
      $region21: #{tpu_custom_call.1} parent=5 // pred_check
        _
      $region22: #{tpu_custom_call.1} parent=5 // pred_check_branch
        %111 = sbr.rel (%p108) target = $region24
      $region23: #{tpu_custom_call.1} parent=5 // pred_region
        %s112 = ssub.s32 %s13, 1
        %s113 = sand.u32 %s26, 1
        %s114 = scalar_lea.sflag [#allocation3], %s113
        %s115 = sand.u32 %s26, 1
        %s116 = smul.addr %s115, 4096
        %s117 = scalar_lea.vmem [#allocation2], %s116
        // Predicated region
        $region25: #{tpu_custom_call.1} parent=23 // pred_check
          %p118 = pneg %p39
        $region26: #{tpu_custom_call.1} parent=23 // pred_check_branch
          %120 = sbr.rel (%p118) target = $region28
        $region27: #{tpu_custom_call.1} parent=23 // pred_region
          %121 = dma.done %s114, 65536
        $region28: #{tpu_custom_call.1} parent=23 // pred_fallthru
          _
        %s122 = sand.u32 %s26, 1
        %s123 = scalar_lea.sflag [#allocation3], %s122
        %s124 = sand.u32 %s26, 1
        %s125 = smul.addr %s124, 4096
        %s126 = scalar_lea.vmem [#allocation2], %s125
        %p127 = pneg %p39
        %p128 = pneg %p36
        %p129 = pneg %p65
        %p130 = pneg %p62
        %s131 = sand.u32 %s52, 1
        %s132 = scalar_lea.sflag [#allocation4], %s131
        %s133 = sand.u32 %s52, 1
        %s134 = smul.addr %s133, 64
        %s135 = scalar_lea.vmem [#allocation5], %s134
        %s136 = smul.u32 64, %s18
        %v137 = vld [vmem:[%s117] sm:$0xff]
        %v138 = vld [vmem:[%s117 + $0x8] sm:$0xff]
        %v139 = vld [vmem:[%s117 + $0x10] sm:$0xff]
        %v140 = vld [vmem:[%s117 + $0x18] sm:$0xff]
        %v141 = vld [vmem:[%s117 + $0x20] sm:$0xff]
        %v142 = vld [vmem:[%s117 + $0x28] sm:$0xff]
        %v143 = vld [vmem:[%s117 + $0x30] sm:$0xff]
        %v144 = vld [vmem:[%s117 + $0x38] sm:$0xff]
        %v145 = vand.u32 2147483647, %v137
        %v146 = vand.u32 2147483647, %v138
        %v147 = vand.u32 2147483647, %v139
        %v148 = vand.u32 2147483647, %v140
        %v149 = vand.u32 2147483647, %v141
        %v150 = vand.u32 2147483647, %v142
        %v151 = vand.u32 2147483647, %v143
        %v152 = vand.u32 2147483647, %v144
        %v153 = vld [vmem:[%s117 + $0x40] sm:$0xff]
        %v154 = vld [vmem:[%s117 + $0x48] sm:$0xff]
        %v155 = vld [vmem:[%s117 + $0x50] sm:$0xff]
        %v156 = vld [vmem:[%s117 + $0x58] sm:$0xff]
        %v157 = vld [vmem:[%s117 + $0x60] sm:$0xff]
        %v158 = vld [vmem:[%s117 + $0x68] sm:$0xff]
        %v159 = vld [vmem:[%s117 + $0x70] sm:$0xff]
        %v160 = vld [vmem:[%s117 + $0x78] sm:$0xff]
        %v161 = vand.u32 2147483647, %v153
        %v162 = vand.u32 2147483647, %v154
        %v163 = vand.u32 2147483647, %v155
        %v164 = vand.u32 2147483647, %v156
        %v165 = vand.u32 2147483647, %v157
        %v166 = vand.u32 2147483647, %v158
        %v167 = vand.u32 2147483647, %v159
        %v168 = vand.u32 2147483647, %v160
        %v169 = vadd.f32 %v145, %v161
        %v170 = vadd.f32 %v146, %v162
        %v171 = vadd.f32 %v147, %v163
        %v172 = vadd.f32 %v148, %v164
        %v173 = vadd.f32 %v149, %v165
        %v174 = vadd.f32 %v150, %v166
        %v175 = vadd.f32 %v151, %v167
        %v176 = vadd.f32 %v152, %v168
        %v177 = vld [vmem:[%s117 + $0x80] sm:$0xff]
        %v178 = vld [vmem:[%s117 + $0x88] sm:$0xff]
        %v179 = vld [vmem:[%s117 + $0x90] sm:$0xff]
        %v180 = vld [vmem:[%s117 + $0x98] sm:$0xff]
        %v181 = vld [vmem:[%s117 + $0xa0] sm:$0xff]
        %v182 = vld [vmem:[%s117 + $0xa8] sm:$0xff]
        %v183 = vld [vmem:[%s117 + $0xb0] sm:$0xff]
        %v184 = vld [vmem:[%s117 + $0xb8] sm:$0xff]
        %v185 = vand.u32 2147483647, %v177
        %v186 = vand.u32 2147483647, %v178
        %v187 = vand.u32 2147483647, %v179
        %v188 = vand.u32 2147483647, %v180
        %v189 = vand.u32 2147483647, %v181
        %v190 = vand.u32 2147483647, %v182
        %v191 = vand.u32 2147483647, %v183
        %v192 = vand.u32 2147483647, %v184
        %v193 = vadd.f32 %v169, %v185
        %v194 = vadd.f32 %v170, %v186
        %v195 = vadd.f32 %v171, %v187
        %v196 = vadd.f32 %v172, %v188
        %v197 = vadd.f32 %v173, %v189
        %v198 = vadd.f32 %v174, %v190
        %v199 = vadd.f32 %v175, %v191
        %v200 = vadd.f32 %v176, %v192
        %v201 = vld [vmem:[%s117 + $0xc0] sm:$0xff]
        %v202 = vld [vmem:[%s117 + $0xc8] sm:$0xff]
        %v203 = vld [vmem:[%s117 + $0xd0] sm:$0xff]
        %v204 = vld [vmem:[%s117 + $0xd8] sm:$0xff]
        %v205 = vld [vmem:[%s117 + $0xe0] sm:$0xff]
        %v206 = vld [vmem:[%s117 + $0xe8] sm:$0xff]
        %v207 = vld [vmem:[%s117 + $0xf0] sm:$0xff]
        %v208 = vld [vmem:[%s117 + $0xf8] sm:$0xff]
        %v209 = vand.u32 2147483647, %v201
        %v210 = vand.u32 2147483647, %v202
        %v211 = vand.u32 2147483647, %v203
        %v212 = vand.u32 2147483647, %v204
        %v213 = vand.u32 2147483647, %v205
        %v214 = vand.u32 2147483647, %v206
        %v215 = vand.u32 2147483647, %v207
        %v216 = vand.u32 2147483647, %v208
        %v217 = vadd.f32 %v193, %v209
        %v218 = vadd.f32 %v194, %v210
        %v219 = vadd.f32 %v195, %v211
        %v220 = vadd.f32 %v196, %v212
        %v221 = vadd.f32 %v197, %v213
        %v222 = vadd.f32 %v198, %v214
        %v223 = vadd.f32 %v199, %v215
        %v224 = vadd.f32 %v200, %v216
        %v225 = vld [vmem:[%s117 + $0x100] sm:$0xff]
        %v226 = vld [vmem:[%s117 + $0x108] sm:$0xff]
        %v227 = vld [vmem:[%s117 + $0x110] sm:$0xff]
        %v228 = vld [vmem:[%s117 + $0x118] sm:$0xff]
        %v229 = vld [vmem:[%s117 + $0x120] sm:$0xff]
        %v230 = vld [vmem:[%s117 + $0x128] sm:$0xff]
        %v231 = vld [vmem:[%s117 + $0x130] sm:$0xff]
        %v232 = vld [vmem:[%s117 + $0x138] sm:$0xff]
        %v233 = vand.u32 2147483647, %v225
        %v234 = vand.u32 2147483647, %v226
        %v235 = vand.u32 2147483647, %v227
        %v236 = vand.u32 2147483647, %v228
        %v237 = vand.u32 2147483647, %v229
        %v238 = vand.u32 2147483647, %v230
        %v239 = vand.u32 2147483647, %v231
        %v240 = vand.u32 2147483647, %v232
        %v241 = vadd.f32 %v217, %v233
        %v242 = vadd.f32 %v218, %v234
        %v243 = vadd.f32 %v219, %v235
        %v244 = vadd.f32 %v220, %v236
        %v245 = vadd.f32 %v221, %v237
        %v246 = vadd.f32 %v222, %v238
        %v247 = vadd.f32 %v223, %v239
        %v248 = vadd.f32 %v224, %v240
        %v249 = vld [vmem:[%s117 + $0x140] sm:$0xff]
        %v250 = vld [vmem:[%s117 + $0x148] sm:$0xff]
        %v251 = vld [vmem:[%s117 + $0x150] sm:$0xff]
        %v252 = vld [vmem:[%s117 + $0x158] sm:$0xff]
        %v253 = vld [vmem:[%s117 + $0x160] sm:$0xff]
        %v254 = vld [vmem:[%s117 + $0x168] sm:$0xff]
        %v255 = vld [vmem:[%s117 + $0x170] sm:$0xff]
        %v256 = vld [vmem:[%s117 + $0x178] sm:$0xff]
        %v257 = vand.u32 2147483647, %v249
        %v258 = vand.u32 2147483647, %v250
        %v259 = vand.u32 2147483647, %v251
        %v260 = vand.u32 2147483647, %v252
        %v261 = vand.u32 2147483647, %v253
        %v262 = vand.u32 2147483647, %v254
        %v263 = vand.u32 2147483647, %v255
        %v264 = vand.u32 2147483647, %v256
        %v265 = vadd.f32 %v241, %v257
        %v266 = vadd.f32 %v242, %v258
        %v267 = vadd.f32 %v243, %v259
        %v268 = vadd.f32 %v244, %v260
        %v269 = vadd.f32 %v245, %v261
        %v270 = vadd.f32 %v246, %v262
        %v271 = vadd.f32 %v247, %v263
        %v272 = vadd.f32 %v248, %v264
        %v273 = vld [vmem:[%s117 + $0x180] sm:$0xff]
        %v274 = vld [vmem:[%s117 + $0x188] sm:$0xff]
        %v275 = vld [vmem:[%s117 + $0x190] sm:$0xff]
        %v276 = vld [vmem:[%s117 + $0x198] sm:$0xff]
        %v277 = vld [vmem:[%s117 + $0x1a0] sm:$0xff]
        %v278 = vld [vmem:[%s117 + $0x1a8] sm:$0xff]
        %v279 = vld [vmem:[%s117 + $0x1b0] sm:$0xff]
        %v280 = vld [vmem:[%s117 + $0x1b8] sm:$0xff]
        %v281 = vand.u32 2147483647, %v273
        %v282 = vand.u32 2147483647, %v274
        %v283 = vand.u32 2147483647, %v275
        %v284 = vand.u32 2147483647, %v276
        %v285 = vand.u32 2147483647, %v277
        %v286 = vand.u32 2147483647, %v278
        %v287 = vand.u32 2147483647, %v279
        %v288 = vand.u32 2147483647, %v280
        %v289 = vadd.f32 %v265, %v281
        %v290 = vadd.f32 %v266, %v282
        %v291 = vadd.f32 %v267, %v283
        %v292 = vadd.f32 %v268, %v284
        %v293 = vadd.f32 %v269, %v285
        %v294 = vadd.f32 %v270, %v286
        %v295 = vadd.f32 %v271, %v287
        %v296 = vadd.f32 %v272, %v288
        %v297 = vld [vmem:[%s117 + $0x1c0] sm:$0xff]
        %v298 = vld [vmem:[%s117 + $0x1c8] sm:$0xff]
        %v299 = vld [vmem:[%s117 + $0x1d0] sm:$0xff]
        %v300 = vld [vmem:[%s117 + $0x1d8] sm:$0xff]
        %v301 = vld [vmem:[%s117 + $0x1e0] sm:$0xff]
        %v302 = vld [vmem:[%s117 + $0x1e8] sm:$0xff]
        %v303 = vld [vmem:[%s117 + $0x1f0] sm:$0xff]
        %v304 = vld [vmem:[%s117 + $0x1f8] sm:$0xff]
        %v305 = vand.u32 2147483647, %v297
        %v306 = vand.u32 2147483647, %v298
        %v307 = vand.u32 2147483647, %v299
        %v308 = vand.u32 2147483647, %v300
        %v309 = vand.u32 2147483647, %v301
        %v310 = vand.u32 2147483647, %v302
        %v311 = vand.u32 2147483647, %v303
        %v312 = vand.u32 2147483647, %v304
        %v313 = vadd.f32 %v289, %v305
        %v314 = vadd.f32 %v290, %v306
        %v315 = vadd.f32 %v291, %v307
        %v316 = vadd.f32 %v292, %v308
        %v317 = vadd.f32 %v293, %v309
        %v318 = vadd.f32 %v294, %v310
        %v319 = vadd.f32 %v295, %v311
        %v320 = vadd.f32 %v296, %v312
        %v321 = vld [vmem:[%s117 + $0x200] sm:$0xff]
        %v322 = vld [vmem:[%s117 + $0x208] sm:$0xff]
        %v323 = vld [vmem:[%s117 + $0x210] sm:$0xff]
        %v324 = vld [vmem:[%s117 + $0x218] sm:$0xff]
        %v325 = vld [vmem:[%s117 + $0x220] sm:$0xff]
        %v326 = vld [vmem:[%s117 + $0x228] sm:$0xff]
        %v327 = vld [vmem:[%s117 + $0x230] sm:$0xff]
        %v328 = vld [vmem:[%s117 + $0x238] sm:$0xff]
        %v329 = vand.u32 2147483647, %v321
        %v330 = vand.u32 2147483647, %v322
        %v331 = vand.u32 2147483647, %v323
        %v332 = vand.u32 2147483647, %v324
        %v333 = vand.u32 2147483647, %v325
        %v334 = vand.u32 2147483647, %v326
        %v335 = vand.u32 2147483647, %v327
        %v336 = vand.u32 2147483647, %v328
        %v337 = vadd.f32 %v313, %v329
        %v338 = vadd.f32 %v314, %v330
        %v339 = vadd.f32 %v315, %v331
        %v340 = vadd.f32 %v316, %v332
        %v341 = vadd.f32 %v317, %v333
        %v342 = vadd.f32 %v318, %v334
        %v343 = vadd.f32 %v319, %v335
        %v344 = vadd.f32 %v320, %v336
        %v345 = vld [vmem:[%s117 + $0x240] sm:$0xff]
        %v346 = vld [vmem:[%s117 + $0x248] sm:$0xff]
        %v347 = vld [vmem:[%s117 + $0x250] sm:$0xff]
        %v348 = vld [vmem:[%s117 + $0x258] sm:$0xff]
        %v349 = vld [vmem:[%s117 + $0x260] sm:$0xff]
        %v350 = vld [vmem:[%s117 + $0x268] sm:$0xff]
        %v351 = vld [vmem:[%s117 + $0x270] sm:$0xff]
        %v352 = vld [vmem:[%s117 + $0x278] sm:$0xff]
        %v353 = vand.u32 2147483647, %v345
        %v354 = vand.u32 2147483647, %v346
        %v355 = vand.u32 2147483647, %v347
        %v356 = vand.u32 2147483647, %v348
        %v357 = vand.u32 2147483647, %v349
        %v358 = vand.u32 2147483647, %v350
        %v359 = vand.u32 2147483647, %v351
        %v360 = vand.u32 2147483647, %v352
        %v361 = vadd.f32 %v337, %v353
        %v362 = vadd.f32 %v338, %v354
        %v363 = vadd.f32 %v339, %v355
        %v364 = vadd.f32 %v340, %v356
        %v365 = vadd.f32 %v341, %v357
        %v366 = vadd.f32 %v342, %v358
        %v367 = vadd.f32 %v343, %v359
        %v368 = vadd.f32 %v344, %v360
        %v369 = vld [vmem:[%s117 + $0x280] sm:$0xff]
        %v370 = vld [vmem:[%s117 + $0x288] sm:$0xff]
        %v371 = vld [vmem:[%s117 + $0x290] sm:$0xff]
        %v372 = vld [vmem:[%s117 + $0x298] sm:$0xff]
        %v373 = vld [vmem:[%s117 + $0x2a0] sm:$0xff]
        %v374 = vld [vmem:[%s117 + $0x2a8] sm:$0xff]
        %v375 = vld [vmem:[%s117 + $0x2b0] sm:$0xff]
        %v376 = vld [vmem:[%s117 + $0x2b8] sm:$0xff]
        %v377 = vand.u32 2147483647, %v369
        %v378 = vand.u32 2147483647, %v370
        %v379 = vand.u32 2147483647, %v371
        %v380 = vand.u32 2147483647, %v372
        %v381 = vand.u32 2147483647, %v373
        %v382 = vand.u32 2147483647, %v374
        %v383 = vand.u32 2147483647, %v375
        %v384 = vand.u32 2147483647, %v376
        %v385 = vadd.f32 %v361, %v377
        %v386 = vadd.f32 %v362, %v378
        %v387 = vadd.f32 %v363, %v379
        %v388 = vadd.f32 %v364, %v380
        %v389 = vadd.f32 %v365, %v381
        %v390 = vadd.f32 %v366, %v382
        %v391 = vadd.f32 %v367, %v383
        %v392 = vadd.f32 %v368, %v384
        %v393 = vld [vmem:[%s117 + $0x2c0] sm:$0xff]
        %v394 = vld [vmem:[%s117 + $0x2c8] sm:$0xff]
        %v395 = vld [vmem:[%s117 + $0x2d0] sm:$0xff]
        %v396 = vld [vmem:[%s117 + $0x2d8] sm:$0xff]
        %v397 = vld [vmem:[%s117 + $0x2e0] sm:$0xff]
        %v398 = vld [vmem:[%s117 + $0x2e8] sm:$0xff]
        %v399 = vld [vmem:[%s117 + $0x2f0] sm:$0xff]
        %v400 = vld [vmem:[%s117 + $0x2f8] sm:$0xff]
        %v401 = vand.u32 2147483647, %v393
        %v402 = vand.u32 2147483647, %v394
        %v403 = vand.u32 2147483647, %v395
        %v404 = vand.u32 2147483647, %v396
        %v405 = vand.u32 2147483647, %v397
        %v406 = vand.u32 2147483647, %v398
        %v407 = vand.u32 2147483647, %v399
        %v408 = vand.u32 2147483647, %v400
        %v409 = vadd.f32 %v385, %v401
        %v410 = vadd.f32 %v386, %v402
        %v411 = vadd.f32 %v387, %v403
        %v412 = vadd.f32 %v388, %v404
        %v413 = vadd.f32 %v389, %v405
        %v414 = vadd.f32 %v390, %v406
        %v415 = vadd.f32 %v391, %v407
        %v416 = vadd.f32 %v392, %v408
        %v417 = vld [vmem:[%s117 + $0x300] sm:$0xff]
        %v418 = vld [vmem:[%s117 + $0x308] sm:$0xff]
        %v419 = vld [vmem:[%s117 + $0x310] sm:$0xff]
        %v420 = vld [vmem:[%s117 + $0x318] sm:$0xff]
        %v421 = vld [vmem:[%s117 + $0x320] sm:$0xff]
        %v422 = vld [vmem:[%s117 + $0x328] sm:$0xff]
        %v423 = vld [vmem:[%s117 + $0x330] sm:$0xff]
        %v424 = vld [vmem:[%s117 + $0x338] sm:$0xff]
        %v425 = vand.u32 2147483647, %v417
        %v426 = vand.u32 2147483647, %v418
        %v427 = vand.u32 2147483647, %v419
        %v428 = vand.u32 2147483647, %v420
        %v429 = vand.u32 2147483647, %v421
        %v430 = vand.u32 2147483647, %v422
        %v431 = vand.u32 2147483647, %v423
        %v432 = vand.u32 2147483647, %v424
        %v433 = vadd.f32 %v409, %v425
        %v434 = vadd.f32 %v410, %v426
        %v435 = vadd.f32 %v411, %v427
        %v436 = vadd.f32 %v412, %v428
        %v437 = vadd.f32 %v413, %v429
        %v438 = vadd.f32 %v414, %v430
        %v439 = vadd.f32 %v415, %v431
        %v440 = vadd.f32 %v416, %v432
        %v441 = vld [vmem:[%s117 + $0x340] sm:$0xff]
        %v442 = vld [vmem:[%s117 + $0x348] sm:$0xff]
        %v443 = vld [vmem:[%s117 + $0x350] sm:$0xff]
        %v444 = vld [vmem:[%s117 + $0x358] sm:$0xff]
        %v445 = vld [vmem:[%s117 + $0x360] sm:$0xff]
        %v446 = vld [vmem:[%s117 + $0x368] sm:$0xff]
        %v447 = vld [vmem:[%s117 + $0x370] sm:$0xff]
        %v448 = vld [vmem:[%s117 + $0x378] sm:$0xff]
        %v449 = vand.u32 2147483647, %v441
        %v450 = vand.u32 2147483647, %v442
        %v451 = vand.u32 2147483647, %v443
        %v452 = vand.u32 2147483647, %v444
        %v453 = vand.u32 2147483647, %v445
        %v454 = vand.u32 2147483647, %v446
        %v455 = vand.u32 2147483647, %v447
        %v456 = vand.u32 2147483647, %v448
        %v457 = vadd.f32 %v433, %v449
        %v458 = vadd.f32 %v434, %v450
        %v459 = vadd.f32 %v435, %v451
        %v460 = vadd.f32 %v436, %v452
        %v461 = vadd.f32 %v437, %v453
        %v462 = vadd.f32 %v438, %v454
        %v463 = vadd.f32 %v439, %v455
        %v464 = vadd.f32 %v440, %v456
        %v465 = vld [vmem:[%s117 + $0x380] sm:$0xff]
        %v466 = vld [vmem:[%s117 + $0x388] sm:$0xff]
        %v467 = vld [vmem:[%s117 + $0x390] sm:$0xff]
        %v468 = vld [vmem:[%s117 + $0x398] sm:$0xff]
        %v469 = vld [vmem:[%s117 + $0x3a0] sm:$0xff]
        %v470 = vld [vmem:[%s117 + $0x3a8] sm:$0xff]
        %v471 = vld [vmem:[%s117 + $0x3b0] sm:$0xff]
        %v472 = vld [vmem:[%s117 + $0x3b8] sm:$0xff]
        %v473 = vand.u32 2147483647, %v465
        %v474 = vand.u32 2147483647, %v466
        %v475 = vand.u32 2147483647, %v467
        %v476 = vand.u32 2147483647, %v468
        %v477 = vand.u32 2147483647, %v469
        %v478 = vand.u32 2147483647, %v470
        %v479 = vand.u32 2147483647, %v471
        %v480 = vand.u32 2147483647, %v472
        %v481 = vadd.f32 %v457, %v473
        %v482 = vadd.f32 %v458, %v474
        %v483 = vadd.f32 %v459, %v475
        %v484 = vadd.f32 %v460, %v476
        %v485 = vadd.f32 %v461, %v477
        %v486 = vadd.f32 %v462, %v478
        %v487 = vadd.f32 %v463, %v479
        %v488 = vadd.f32 %v464, %v480
        %v489 = vld [vmem:[%s117 + $0x3c0] sm:$0xff]
        %v490 = vld [vmem:[%s117 + $0x3c8] sm:$0xff]
        %v491 = vld [vmem:[%s117 + $0x3d0] sm:$0xff]
        %v492 = vld [vmem:[%s117 + $0x3d8] sm:$0xff]
        %v493 = vld [vmem:[%s117 + $0x3e0] sm:$0xff]
        %v494 = vld [vmem:[%s117 + $0x3e8] sm:$0xff]
        %v495 = vld [vmem:[%s117 + $0x3f0] sm:$0xff]
        %v496 = vld [vmem:[%s117 + $0x3f8] sm:$0xff]
        %v497 = vand.u32 2147483647, %v489
        %v498 = vand.u32 2147483647, %v490
        %v499 = vand.u32 2147483647, %v491
        %v500 = vand.u32 2147483647, %v492
        %v501 = vand.u32 2147483647, %v493
        %v502 = vand.u32 2147483647, %v494
        %v503 = vand.u32 2147483647, %v495
        %v504 = vand.u32 2147483647, %v496
        %v505 = vadd.f32 %v481, %v497
        %v506 = vadd.f32 %v482, %v498
        %v507 = vadd.f32 %v483, %v499
        %v508 = vadd.f32 %v484, %v500
        %v509 = vadd.f32 %v485, %v501
        %v510 = vadd.f32 %v486, %v502
        %v511 = vadd.f32 %v487, %v503
        %v512 = vadd.f32 %v488, %v504
        %v513 = vld [vmem:[%s117 + $0x400] sm:$0xff]
        %v514 = vld [vmem:[%s117 + $0x408] sm:$0xff]
        %v515 = vld [vmem:[%s117 + $0x410] sm:$0xff]
        %v516 = vld [vmem:[%s117 + $0x418] sm:$0xff]
        %v517 = vld [vmem:[%s117 + $0x420] sm:$0xff]
        %v518 = vld [vmem:[%s117 + $0x428] sm:$0xff]
        %v519 = vld [vmem:[%s117 + $0x430] sm:$0xff]
        %v520 = vld [vmem:[%s117 + $0x438] sm:$0xff]
        %v521 = vand.u32 2147483647, %v513
        %v522 = vand.u32 2147483647, %v514
        %v523 = vand.u32 2147483647, %v515
        %v524 = vand.u32 2147483647, %v516
        %v525 = vand.u32 2147483647, %v517
        %v526 = vand.u32 2147483647, %v518
        %v527 = vand.u32 2147483647, %v519
        %v528 = vand.u32 2147483647, %v520
        %v529 = vadd.f32 %v505, %v521
        %v530 = vadd.f32 %v506, %v522
        %v531 = vadd.f32 %v507, %v523
        %v532 = vadd.f32 %v508, %v524
        %v533 = vadd.f32 %v509, %v525
        %v534 = vadd.f32 %v510, %v526
        %v535 = vadd.f32 %v511, %v527
        %v536 = vadd.f32 %v512, %v528
        %v537 = vld [vmem:[%s117 + $0x440] sm:$0xff]
        %v538 = vld [vmem:[%s117 + $0x448] sm:$0xff]
        %v539 = vld [vmem:[%s117 + $0x450] sm:$0xff]
        %v540 = vld [vmem:[%s117 + $0x458] sm:$0xff]
        %v541 = vld [vmem:[%s117 + $0x460] sm:$0xff]
        %v542 = vld [vmem:[%s117 + $0x468] sm:$0xff]
        %v543 = vld [vmem:[%s117 + $0x470] sm:$0xff]
        %v544 = vld [vmem:[%s117 + $0x478] sm:$0xff]
        %v545 = vand.u32 2147483647, %v537
        %v546 = vand.u32 2147483647, %v538
        %v547 = vand.u32 2147483647, %v539
        %v548 = vand.u32 2147483647, %v540
        %v549 = vand.u32 2147483647, %v541
        %v550 = vand.u32 2147483647, %v542
        %v551 = vand.u32 2147483647, %v543
        %v552 = vand.u32 2147483647, %v544
        %v553 = vadd.f32 %v529, %v545
        %v554 = vadd.f32 %v530, %v546
        %v555 = vadd.f32 %v531, %v547
        %v556 = vadd.f32 %v532, %v548
        %v557 = vadd.f32 %v533, %v549
        %v558 = vadd.f32 %v534, %v550
        %v559 = vadd.f32 %v535, %v551
        %v560 = vadd.f32 %v536, %v552
        %v561 = vld [vmem:[%s117 + $0x480] sm:$0xff]
        %v562 = vld [vmem:[%s117 + $0x488] sm:$0xff]
        %v563 = vld [vmem:[%s117 + $0x490] sm:$0xff]
        %v564 = vld [vmem:[%s117 + $0x498] sm:$0xff]
        %v565 = vld [vmem:[%s117 + $0x4a0] sm:$0xff]
        %v566 = vld [vmem:[%s117 + $0x4a8] sm:$0xff]
        %v567 = vld [vmem:[%s117 + $0x4b0] sm:$0xff]
        %v568 = vld [vmem:[%s117 + $0x4b8] sm:$0xff]
        %v569 = vand.u32 2147483647, %v561
        %v570 = vand.u32 2147483647, %v562
        %v571 = vand.u32 2147483647, %v563
        %v572 = vand.u32 2147483647, %v564
        %v573 = vand.u32 2147483647, %v565
        %v574 = vand.u32 2147483647, %v566
        %v575 = vand.u32 2147483647, %v567
        %v576 = vand.u32 2147483647, %v568
        %v577 = vadd.f32 %v553, %v569
        %v578 = vadd.f32 %v554, %v570
        %v579 = vadd.f32 %v555, %v571
        %v580 = vadd.f32 %v556, %v572
        %v581 = vadd.f32 %v557, %v573
        %v582 = vadd.f32 %v558, %v574
        %v583 = vadd.f32 %v559, %v575
        %v584 = vadd.f32 %v560, %v576
        %v585 = vld [vmem:[%s117 + $0x4c0] sm:$0xff]
        %v586 = vld [vmem:[%s117 + $0x4c8] sm:$0xff]
        %v587 = vld [vmem:[%s117 + $0x4d0] sm:$0xff]
        %v588 = vld [vmem:[%s117 + $0x4d8] sm:$0xff]
        %v589 = vld [vmem:[%s117 + $0x4e0] sm:$0xff]
        %v590 = vld [vmem:[%s117 + $0x4e8] sm:$0xff]
        %v591 = vld [vmem:[%s117 + $0x4f0] sm:$0xff]
        %v592 = vld [vmem:[%s117 + $0x4f8] sm:$0xff]
        %v593 = vand.u32 2147483647, %v585
        %v594 = vand.u32 2147483647, %v586
        %v595 = vand.u32 2147483647, %v587
        %v596 = vand.u32 2147483647, %v588
        %v597 = vand.u32 2147483647, %v589
        %v598 = vand.u32 2147483647, %v590
        %v599 = vand.u32 2147483647, %v591
        %v600 = vand.u32 2147483647, %v592
        %v601 = vadd.f32 %v577, %v593
        %v602 = vadd.f32 %v578, %v594
        %v603 = vadd.f32 %v579, %v595
        %v604 = vadd.f32 %v580, %v596
        %v605 = vadd.f32 %v581, %v597
        %v606 = vadd.f32 %v582, %v598
        %v607 = vadd.f32 %v583, %v599
        %v608 = vadd.f32 %v584, %v600
        %v609 = vld [vmem:[%s117 + $0x500] sm:$0xff]
        %v610 = vld [vmem:[%s117 + $0x508] sm:$0xff]
        %v611 = vld [vmem:[%s117 + $0x510] sm:$0xff]
        %v612 = vld [vmem:[%s117 + $0x518] sm:$0xff]
        %v613 = vld [vmem:[%s117 + $0x520] sm:$0xff]
        %v614 = vld [vmem:[%s117 + $0x528] sm:$0xff]
        %v615 = vld [vmem:[%s117 + $0x530] sm:$0xff]
        %v616 = vld [vmem:[%s117 + $0x538] sm:$0xff]
        %v617 = vand.u32 2147483647, %v609
        %v618 = vand.u32 2147483647, %v610
        %v619 = vand.u32 2147483647, %v611
        %v620 = vand.u32 2147483647, %v612
        %v621 = vand.u32 2147483647, %v613
        %v622 = vand.u32 2147483647, %v614
        %v623 = vand.u32 2147483647, %v615
        %v624 = vand.u32 2147483647, %v616
        %v625 = vadd.f32 %v601, %v617
        %v626 = vadd.f32 %v602, %v618
        %v627 = vadd.f32 %v603, %v619
        %v628 = vadd.f32 %v604, %v620
        %v629 = vadd.f32 %v605, %v621
        %v630 = vadd.f32 %v606, %v622
        %v631 = vadd.f32 %v607, %v623
        %v632 = vadd.f32 %v608, %v624
        %v633 = vld [vmem:[%s117 + $0x540] sm:$0xff]
        %v634 = vld [vmem:[%s117 + $0x548] sm:$0xff]
        %v635 = vld [vmem:[%s117 + $0x550] sm:$0xff]
        %v636 = vld [vmem:[%s117 + $0x558] sm:$0xff]
        %v637 = vld [vmem:[%s117 + $0x560] sm:$0xff]
        %v638 = vld [vmem:[%s117 + $0x568] sm:$0xff]
        %v639 = vld [vmem:[%s117 + $0x570] sm:$0xff]
        %v640 = vld [vmem:[%s117 + $0x578] sm:$0xff]
        %v641 = vand.u32 2147483647, %v633
        %v642 = vand.u32 2147483647, %v634
        %v643 = vand.u32 2147483647, %v635
        %v644 = vand.u32 2147483647, %v636
        %v645 = vand.u32 2147483647, %v637
        %v646 = vand.u32 2147483647, %v638
        %v647 = vand.u32 2147483647, %v639
        %v648 = vand.u32 2147483647, %v640
        %v649 = vadd.f32 %v625, %v641
        %v650 = vadd.f32 %v626, %v642
        %v651 = vadd.f32 %v627, %v643
        %v652 = vadd.f32 %v628, %v644
        %v653 = vadd.f32 %v629, %v645
        %v654 = vadd.f32 %v630, %v646
        %v655 = vadd.f32 %v631, %v647
        %v656 = vadd.f32 %v632, %v648
        %v657 = vld [vmem:[%s117 + $0x580] sm:$0xff]
        %v658 = vld [vmem:[%s117 + $0x588] sm:$0xff]
        %v659 = vld [vmem:[%s117 + $0x590] sm:$0xff]
        %v660 = vld [vmem:[%s117 + $0x598] sm:$0xff]
        %v661 = vld [vmem:[%s117 + $0x5a0] sm:$0xff]
        %v662 = vld [vmem:[%s117 + $0x5a8] sm:$0xff]
        %v663 = vld [vmem:[%s117 + $0x5b0] sm:$0xff]
        %v664 = vld [vmem:[%s117 + $0x5b8] sm:$0xff]
        %v665 = vand.u32 2147483647, %v657
        %v666 = vand.u32 2147483647, %v658
        %v667 = vand.u32 2147483647, %v659
        %v668 = vand.u32 2147483647, %v660
        %v669 = vand.u32 2147483647, %v661
        %v670 = vand.u32 2147483647, %v662
        %v671 = vand.u32 2147483647, %v663
        %v672 = vand.u32 2147483647, %v664
        %v673 = vadd.f32 %v649, %v665
        %v674 = vadd.f32 %v650, %v666
        %v675 = vadd.f32 %v651, %v667
        %v676 = vadd.f32 %v652, %v668
        %v677 = vadd.f32 %v653, %v669
        %v678 = vadd.f32 %v654, %v670
        %v679 = vadd.f32 %v655, %v671
        %v680 = vadd.f32 %v656, %v672
        %v681 = vld [vmem:[%s117 + $0x5c0] sm:$0xff]
        %v682 = vld [vmem:[%s117 + $0x5c8] sm:$0xff]
        %v683 = vld [vmem:[%s117 + $0x5d0] sm:$0xff]
        %v684 = vld [vmem:[%s117 + $0x5d8] sm:$0xff]
        %v685 = vld [vmem:[%s117 + $0x5e0] sm:$0xff]
        %v686 = vld [vmem:[%s117 + $0x5e8] sm:$0xff]
        %v687 = vld [vmem:[%s117 + $0x5f0] sm:$0xff]
        %v688 = vld [vmem:[%s117 + $0x5f8] sm:$0xff]
        %v689 = vand.u32 2147483647, %v681
        %v690 = vand.u32 2147483647, %v682
        %v691 = vand.u32 2147483647, %v683
        %v692 = vand.u32 2147483647, %v684
        %v693 = vand.u32 2147483647, %v685
        %v694 = vand.u32 2147483647, %v686
        %v695 = vand.u32 2147483647, %v687
        %v696 = vand.u32 2147483647, %v688
        %v697 = vadd.f32 %v673, %v689
        %v698 = vadd.f32 %v674, %v690
        %v699 = vadd.f32 %v675, %v691
        %v700 = vadd.f32 %v676, %v692
        %v701 = vadd.f32 %v677, %v693
        %v702 = vadd.f32 %v678, %v694
        %v703 = vadd.f32 %v679, %v695
        %v704 = vadd.f32 %v680, %v696
        %v705 = vld [vmem:[%s117 + $0x600] sm:$0xff]
        %v706 = vld [vmem:[%s117 + $0x608] sm:$0xff]
        %v707 = vld [vmem:[%s117 + $0x610] sm:$0xff]
        %v708 = vld [vmem:[%s117 + $0x618] sm:$0xff]
        %v709 = vld [vmem:[%s117 + $0x620] sm:$0xff]
        %v710 = vld [vmem:[%s117 + $0x628] sm:$0xff]
        %v711 = vld [vmem:[%s117 + $0x630] sm:$0xff]
        %v712 = vld [vmem:[%s117 + $0x638] sm:$0xff]
        %v713 = vand.u32 2147483647, %v705
        %v714 = vand.u32 2147483647, %v706
        %v715 = vand.u32 2147483647, %v707
        %v716 = vand.u32 2147483647, %v708
        %v717 = vand.u32 2147483647, %v709
        %v718 = vand.u32 2147483647, %v710
        %v719 = vand.u32 2147483647, %v711
        %v720 = vand.u32 2147483647, %v712
        %v721 = vadd.f32 %v697, %v713
        %v722 = vadd.f32 %v698, %v714
        %v723 = vadd.f32 %v699, %v715
        %v724 = vadd.f32 %v700, %v716
        %v725 = vadd.f32 %v701, %v717
        %v726 = vadd.f32 %v702, %v718
        %v727 = vadd.f32 %v703, %v719
        %v728 = vadd.f32 %v704, %v720
        %v729 = vld [vmem:[%s117 + $0x640] sm:$0xff]
        %v730 = vld [vmem:[%s117 + $0x648] sm:$0xff]
        %v731 = vld [vmem:[%s117 + $0x650] sm:$0xff]
        %v732 = vld [vmem:[%s117 + $0x658] sm:$0xff]
        %v733 = vld [vmem:[%s117 + $0x660] sm:$0xff]
        %v734 = vld [vmem:[%s117 + $0x668] sm:$0xff]
        %v735 = vld [vmem:[%s117 + $0x670] sm:$0xff]
        %v736 = vld [vmem:[%s117 + $0x678] sm:$0xff]
        %v737 = vand.u32 2147483647, %v729
        %v738 = vand.u32 2147483647, %v730
        %v739 = vand.u32 2147483647, %v731
        %v740 = vand.u32 2147483647, %v732
        %v741 = vand.u32 2147483647, %v733
        %v742 = vand.u32 2147483647, %v734
        %v743 = vand.u32 2147483647, %v735
        %v744 = vand.u32 2147483647, %v736
        %v745 = vadd.f32 %v721, %v737
        %v746 = vadd.f32 %v722, %v738
        %v747 = vadd.f32 %v723, %v739
        %v748 = vadd.f32 %v724, %v740
        %v749 = vadd.f32 %v725, %v741
        %v750 = vadd.f32 %v726, %v742
        %v751 = vadd.f32 %v727, %v743
        %v752 = vadd.f32 %v728, %v744
        %v753 = vld [vmem:[%s117 + $0x680] sm:$0xff]
        %v754 = vld [vmem:[%s117 + $0x688] sm:$0xff]
        %v755 = vld [vmem:[%s117 + $0x690] sm:$0xff]
        %v756 = vld [vmem:[%s117 + $0x698] sm:$0xff]
        %v757 = vld [vmem:[%s117 + $0x6a0] sm:$0xff]
        %v758 = vld [vmem:[%s117 + $0x6a8] sm:$0xff]
        %v759 = vld [vmem:[%s117 + $0x6b0] sm:$0xff]
        %v760 = vld [vmem:[%s117 + $0x6b8] sm:$0xff]
        %v761 = vand.u32 2147483647, %v753
        %v762 = vand.u32 2147483647, %v754
        %v763 = vand.u32 2147483647, %v755
        %v764 = vand.u32 2147483647, %v756
        %v765 = vand.u32 2147483647, %v757
        %v766 = vand.u32 2147483647, %v758
        %v767 = vand.u32 2147483647, %v759
        %v768 = vand.u32 2147483647, %v760
        %v769 = vadd.f32 %v745, %v761
        %v770 = vadd.f32 %v746, %v762
        %v771 = vadd.f32 %v747, %v763
        %v772 = vadd.f32 %v748, %v764
        %v773 = vadd.f32 %v749, %v765
        %v774 = vadd.f32 %v750, %v766
        %v775 = vadd.f32 %v751, %v767
        %v776 = vadd.f32 %v752, %v768
        %v777 = vld [vmem:[%s117 + $0x6c0] sm:$0xff]
        %v778 = vld [vmem:[%s117 + $0x6c8] sm:$0xff]
        %v779 = vld [vmem:[%s117 + $0x6d0] sm:$0xff]
        %v780 = vld [vmem:[%s117 + $0x6d8] sm:$0xff]
        %v781 = vld [vmem:[%s117 + $0x6e0] sm:$0xff]
        %v782 = vld [vmem:[%s117 + $0x6e8] sm:$0xff]
        %v783 = vld [vmem:[%s117 + $0x6f0] sm:$0xff]
        %v784 = vld [vmem:[%s117 + $0x6f8] sm:$0xff]
        %v785 = vand.u32 2147483647, %v777
        %v786 = vand.u32 2147483647, %v778
        %v787 = vand.u32 2147483647, %v779
        %v788 = vand.u32 2147483647, %v780
        %v789 = vand.u32 2147483647, %v781
        %v790 = vand.u32 2147483647, %v782
        %v791 = vand.u32 2147483647, %v783
        %v792 = vand.u32 2147483647, %v784
        %v793 = vadd.f32 %v769, %v785
        %v794 = vadd.f32 %v770, %v786
        %v795 = vadd.f32 %v771, %v787
        %v796 = vadd.f32 %v772, %v788
        %v797 = vadd.f32 %v773, %v789
        %v798 = vadd.f32 %v774, %v790
        %v799 = vadd.f32 %v775, %v791
        %v800 = vadd.f32 %v776, %v792
        %v801 = vld [vmem:[%s117 + $0x700] sm:$0xff]
        %v802 = vld [vmem:[%s117 + $0x708] sm:$0xff]
        %v803 = vld [vmem:[%s117 + $0x710] sm:$0xff]
        %v804 = vld [vmem:[%s117 + $0x718] sm:$0xff]
        %v805 = vld [vmem:[%s117 + $0x720] sm:$0xff]
        %v806 = vld [vmem:[%s117 + $0x728] sm:$0xff]
        %v807 = vld [vmem:[%s117 + $0x730] sm:$0xff]
        %v808 = vld [vmem:[%s117 + $0x738] sm:$0xff]
        %v809 = vand.u32 2147483647, %v801
        %v810 = vand.u32 2147483647, %v802
        %v811 = vand.u32 2147483647, %v803
        %v812 = vand.u32 2147483647, %v804
        %v813 = vand.u32 2147483647, %v805
        %v814 = vand.u32 2147483647, %v806
        %v815 = vand.u32 2147483647, %v807
        %v816 = vand.u32 2147483647, %v808
        %v817 = vadd.f32 %v793, %v809
        %v818 = vadd.f32 %v794, %v810
        %v819 = vadd.f32 %v795, %v811
        %v820 = vadd.f32 %v796, %v812
        %v821 = vadd.f32 %v797, %v813
        %v822 = vadd.f32 %v798, %v814
        %v823 = vadd.f32 %v799, %v815
        %v824 = vadd.f32 %v800, %v816
        %v825 = vld [vmem:[%s117 + $0x740] sm:$0xff]
        %v826 = vld [vmem:[%s117 + $0x748] sm:$0xff]
        %v827 = vld [vmem:[%s117 + $0x750] sm:$0xff]
        %v828 = vld [vmem:[%s117 + $0x758] sm:$0xff]
        %v829 = vld [vmem:[%s117 + $0x760] sm:$0xff]
        %v830 = vld [vmem:[%s117 + $0x768] sm:$0xff]
        %v831 = vld [vmem:[%s117 + $0x770] sm:$0xff]
        %v832 = vld [vmem:[%s117 + $0x778] sm:$0xff]
        %v833 = vand.u32 2147483647, %v825
        %v834 = vand.u32 2147483647, %v826
        %v835 = vand.u32 2147483647, %v827
        %v836 = vand.u32 2147483647, %v828
        %v837 = vand.u32 2147483647, %v829
        %v838 = vand.u32 2147483647, %v830
        %v839 = vand.u32 2147483647, %v831
        %v840 = vand.u32 2147483647, %v832
        %v841 = vadd.f32 %v817, %v833
        %v842 = vadd.f32 %v818, %v834
        %v843 = vadd.f32 %v819, %v835
        %v844 = vadd.f32 %v820, %v836
        %v845 = vadd.f32 %v821, %v837
        %v846 = vadd.f32 %v822, %v838
        %v847 = vadd.f32 %v823, %v839
        %v848 = vadd.f32 %v824, %v840
        %v849 = vld [vmem:[%s117 + $0x780] sm:$0xff]
        %v850 = vld [vmem:[%s117 + $0x788] sm:$0xff]
        %v851 = vld [vmem:[%s117 + $0x790] sm:$0xff]
        %v852 = vld [vmem:[%s117 + $0x798] sm:$0xff]
        %v853 = vld [vmem:[%s117 + $0x7a0] sm:$0xff]
        %v854 = vld [vmem:[%s117 + $0x7a8] sm:$0xff]
        %v855 = vld [vmem:[%s117 + $0x7b0] sm:$0xff]
        %v856 = vld [vmem:[%s117 + $0x7b8] sm:$0xff]
        %v857 = vand.u32 2147483647, %v849
        %v858 = vand.u32 2147483647, %v850
        %v859 = vand.u32 2147483647, %v851
        %v860 = vand.u32 2147483647, %v852
        %v861 = vand.u32 2147483647, %v853
        %v862 = vand.u32 2147483647, %v854
        %v863 = vand.u32 2147483647, %v855
        %v864 = vand.u32 2147483647, %v856
        %v865 = vadd.f32 %v841, %v857
        %v866 = vadd.f32 %v842, %v858
        %v867 = vadd.f32 %v843, %v859
        %v868 = vadd.f32 %v844, %v860
        %v869 = vadd.f32 %v845, %v861
        %v870 = vadd.f32 %v846, %v862
        %v871 = vadd.f32 %v847, %v863
        %v872 = vadd.f32 %v848, %v864
        %v873 = vld [vmem:[%s117 + $0x7c0] sm:$0xff]
        %v874 = vld [vmem:[%s117 + $0x7c8] sm:$0xff]
        %v875 = vld [vmem:[%s117 + $0x7d0] sm:$0xff]
        %v876 = vld [vmem:[%s117 + $0x7d8] sm:$0xff]
        %v877 = vld [vmem:[%s117 + $0x7e0] sm:$0xff]
        %v878 = vld [vmem:[%s117 + $0x7e8] sm:$0xff]
        %v879 = vld [vmem:[%s117 + $0x7f0] sm:$0xff]
        %v880 = vld [vmem:[%s117 + $0x7f8] sm:$0xff]
        %v881 = vand.u32 2147483647, %v873
        %v882 = vand.u32 2147483647, %v874
        %v883 = vand.u32 2147483647, %v875
        %v884 = vand.u32 2147483647, %v876
        %v885 = vand.u32 2147483647, %v877
        %v886 = vand.u32 2147483647, %v878
        %v887 = vand.u32 2147483647, %v879
        %v888 = vand.u32 2147483647, %v880
        %v889 = vadd.f32 %v865, %v881
        %v890 = vadd.f32 %v866, %v882
        %v891 = vadd.f32 %v867, %v883
        %v892 = vadd.f32 %v868, %v884
        %v893 = vadd.f32 %v869, %v885
        %v894 = vadd.f32 %v870, %v886
        %v895 = vadd.f32 %v871, %v887
        %v896 = vadd.f32 %v872, %v888
        %v897 = vld [vmem:[%s117 + $0x800] sm:$0xff]
        %v898 = vld [vmem:[%s117 + $0x808] sm:$0xff]
        %v899 = vld [vmem:[%s117 + $0x810] sm:$0xff]
        %v900 = vld [vmem:[%s117 + $0x818] sm:$0xff]
        %v901 = vld [vmem:[%s117 + $0x820] sm:$0xff]
        %v902 = vld [vmem:[%s117 + $0x828] sm:$0xff]
        %v903 = vld [vmem:[%s117 + $0x830] sm:$0xff]
        %v904 = vld [vmem:[%s117 + $0x838] sm:$0xff]
        %v905 = vand.u32 2147483647, %v897
        %v906 = vand.u32 2147483647, %v898
        %v907 = vand.u32 2147483647, %v899
        %v908 = vand.u32 2147483647, %v900
        %v909 = vand.u32 2147483647, %v901
        %v910 = vand.u32 2147483647, %v902
        %v911 = vand.u32 2147483647, %v903
        %v912 = vand.u32 2147483647, %v904
        %v913 = vadd.f32 %v889, %v905
        %v914 = vadd.f32 %v890, %v906
        %v915 = vadd.f32 %v891, %v907
        %v916 = vadd.f32 %v892, %v908
        %v917 = vadd.f32 %v893, %v909
        %v918 = vadd.f32 %v894, %v910
        %v919 = vadd.f32 %v895, %v911
        %v920 = vadd.f32 %v896, %v912
        %v921 = vld [vmem:[%s117 + $0x840] sm:$0xff]
        %v922 = vld [vmem:[%s117 + $0x848] sm:$0xff]
        %v923 = vld [vmem:[%s117 + $0x850] sm:$0xff]
        %v924 = vld [vmem:[%s117 + $0x858] sm:$0xff]
        %v925 = vld [vmem:[%s117 + $0x860] sm:$0xff]
        %v926 = vld [vmem:[%s117 + $0x868] sm:$0xff]
        %v927 = vld [vmem:[%s117 + $0x870] sm:$0xff]
        %v928 = vld [vmem:[%s117 + $0x878] sm:$0xff]
        %v929 = vand.u32 2147483647, %v921
        %v930 = vand.u32 2147483647, %v922
        %v931 = vand.u32 2147483647, %v923
        %v932 = vand.u32 2147483647, %v924
        %v933 = vand.u32 2147483647, %v925
        %v934 = vand.u32 2147483647, %v926
        %v935 = vand.u32 2147483647, %v927
        %v936 = vand.u32 2147483647, %v928
        %v937 = vadd.f32 %v913, %v929
        %v938 = vadd.f32 %v914, %v930
        %v939 = vadd.f32 %v915, %v931
        %v940 = vadd.f32 %v916, %v932
        %v941 = vadd.f32 %v917, %v933
        %v942 = vadd.f32 %v918, %v934
        %v943 = vadd.f32 %v919, %v935
        %v944 = vadd.f32 %v920, %v936
        %v945 = vld [vmem:[%s117 + $0x880] sm:$0xff]
        %v946 = vld [vmem:[%s117 + $0x888] sm:$0xff]
        %v947 = vld [vmem:[%s117 + $0x890] sm:$0xff]
        %v948 = vld [vmem:[%s117 + $0x898] sm:$0xff]
        %v949 = vld [vmem:[%s117 + $0x8a0] sm:$0xff]
        %v950 = vld [vmem:[%s117 + $0x8a8] sm:$0xff]
        %v951 = vld [vmem:[%s117 + $0x8b0] sm:$0xff]
        %v952 = vld [vmem:[%s117 + $0x8b8] sm:$0xff]
        %v953 = vand.u32 2147483647, %v945
        %v954 = vand.u32 2147483647, %v946
        %v955 = vand.u32 2147483647, %v947
        %v956 = vand.u32 2147483647, %v948
        %v957 = vand.u32 2147483647, %v949
        %v958 = vand.u32 2147483647, %v950
        %v959 = vand.u32 2147483647, %v951
        %v960 = vand.u32 2147483647, %v952
        %v961 = vadd.f32 %v937, %v953
        %v962 = vadd.f32 %v938, %v954
        %v963 = vadd.f32 %v939, %v955
        %v964 = vadd.f32 %v940, %v956
        %v965 = vadd.f32 %v941, %v957
        %v966 = vadd.f32 %v942, %v958
        %v967 = vadd.f32 %v943, %v959
        %v968 = vadd.f32 %v944, %v960
        %v969 = vld [vmem:[%s117 + $0x8c0] sm:$0xff]
        %v970 = vld [vmem:[%s117 + $0x8c8] sm:$0xff]
        %v971 = vld [vmem:[%s117 + $0x8d0] sm:$0xff]
        %v972 = vld [vmem:[%s117 + $0x8d8] sm:$0xff]
        %v973 = vld [vmem:[%s117 + $0x8e0] sm:$0xff]
        %v974 = vld [vmem:[%s117 + $0x8e8] sm:$0xff]
        %v975 = vld [vmem:[%s117 + $0x8f0] sm:$0xff]
        %v976 = vld [vmem:[%s117 + $0x8f8] sm:$0xff]
        %v977 = vand.u32 2147483647, %v969
        %v978 = vand.u32 2147483647, %v970
        %v979 = vand.u32 2147483647, %v971
        %v980 = vand.u32 2147483647, %v972
        %v981 = vand.u32 2147483647, %v973
        %v982 = vand.u32 2147483647, %v974
        %v983 = vand.u32 2147483647, %v975
        %v984 = vand.u32 2147483647, %v976
        %v985 = vadd.f32 %v961, %v977
        %v986 = vadd.f32 %v962, %v978
        %v987 = vadd.f32 %v963, %v979
        %v988 = vadd.f32 %v964, %v980
        %v989 = vadd.f32 %v965, %v981
        %v990 = vadd.f32 %v966, %v982
        %v991 = vadd.f32 %v967, %v983
        %v992 = vadd.f32 %v968, %v984
        %v993 = vld [vmem:[%s117 + $0x900] sm:$0xff]
        %v994 = vld [vmem:[%s117 + $0x908] sm:$0xff]
        %v995 = vld [vmem:[%s117 + $0x910] sm:$0xff]
        %v996 = vld [vmem:[%s117 + $0x918] sm:$0xff]
        %v997 = vld [vmem:[%s117 + $0x920] sm:$0xff]
        %v998 = vld [vmem:[%s117 + $0x928] sm:$0xff]
        %v999 = vld [vmem:[%s117 + $0x930] sm:$0xff]
        %v1000 = vld [vmem:[%s117 + $0x938] sm:$0xff]
        %v1001 = vand.u32 2147483647, %v993
        %v1002 = vand.u32 2147483647, %v994
        %v1003 = vand.u32 2147483647, %v995
        %v1004 = vand.u32 2147483647, %v996
        %v1005 = vand.u32 2147483647, %v997
        %v1006 = vand.u32 2147483647, %v998
        %v1007 = vand.u32 2147483647, %v999
        %v1008 = vand.u32 2147483647, %v1000
        %v1009 = vadd.f32 %v985, %v1001
        %v1010 = vadd.f32 %v986, %v1002
        %v1011 = vadd.f32 %v987, %v1003
        %v1012 = vadd.f32 %v988, %v1004
        %v1013 = vadd.f32 %v989, %v1005
        %v1014 = vadd.f32 %v990, %v1006
        %v1015 = vadd.f32 %v991, %v1007
        %v1016 = vadd.f32 %v992, %v1008
        %v1017 = vld [vmem:[%s117 + $0x940] sm:$0xff]
        %v1018 = vld [vmem:[%s117 + $0x948] sm:$0xff]
        %v1019 = vld [vmem:[%s117 + $0x950] sm:$0xff]
        %v1020 = vld [vmem:[%s117 + $0x958] sm:$0xff]
        %v1021 = vld [vmem:[%s117 + $0x960] sm:$0xff]
        %v1022 = vld [vmem:[%s117 + $0x968] sm:$0xff]
        %v1023 = vld [vmem:[%s117 + $0x970] sm:$0xff]
        %v1024 = vld [vmem:[%s117 + $0x978] sm:$0xff]
        %v1025 = vand.u32 2147483647, %v1017
        %v1026 = vand.u32 2147483647, %v1018
        %v1027 = vand.u32 2147483647, %v1019
        %v1028 = vand.u32 2147483647, %v1020
        %v1029 = vand.u32 2147483647, %v1021
        %v1030 = vand.u32 2147483647, %v1022
        %v1031 = vand.u32 2147483647, %v1023
        %v1032 = vand.u32 2147483647, %v1024
        %v1033 = vadd.f32 %v1009, %v1025
        %v1034 = vadd.f32 %v1010, %v1026
        %v1035 = vadd.f32 %v1011, %v1027
        %v1036 = vadd.f32 %v1012, %v1028
        %v1037 = vadd.f32 %v1013, %v1029
        %v1038 = vadd.f32 %v1014, %v1030
        %v1039 = vadd.f32 %v1015, %v1031
        %v1040 = vadd.f32 %v1016, %v1032
        %v1041 = vld [vmem:[%s117 + $0x980] sm:$0xff]
        %v1042 = vld [vmem:[%s117 + $0x988] sm:$0xff]
        %v1043 = vld [vmem:[%s117 + $0x990] sm:$0xff]
        %v1044 = vld [vmem:[%s117 + $0x998] sm:$0xff]
        %v1045 = vld [vmem:[%s117 + $0x9a0] sm:$0xff]
        %v1046 = vld [vmem:[%s117 + $0x9a8] sm:$0xff]
        %v1047 = vld [vmem:[%s117 + $0x9b0] sm:$0xff]
        %v1048 = vld [vmem:[%s117 + $0x9b8] sm:$0xff]
        %v1049 = vand.u32 2147483647, %v1041
        %v1050 = vand.u32 2147483647, %v1042
        %v1051 = vand.u32 2147483647, %v1043
        %v1052 = vand.u32 2147483647, %v1044
        %v1053 = vand.u32 2147483647, %v1045
        %v1054 = vand.u32 2147483647, %v1046
        %v1055 = vand.u32 2147483647, %v1047
        %v1056 = vand.u32 2147483647, %v1048
        %v1057 = vadd.f32 %v1033, %v1049
        %v1058 = vadd.f32 %v1034, %v1050
        %v1059 = vadd.f32 %v1035, %v1051
        %v1060 = vadd.f32 %v1036, %v1052
        %v1061 = vadd.f32 %v1037, %v1053
        %v1062 = vadd.f32 %v1038, %v1054
        %v1063 = vadd.f32 %v1039, %v1055
        %v1064 = vadd.f32 %v1040, %v1056
        %v1065 = vld [vmem:[%s117 + $0x9c0] sm:$0xff]
        %v1066 = vld [vmem:[%s117 + $0x9c8] sm:$0xff]
        %v1067 = vld [vmem:[%s117 + $0x9d0] sm:$0xff]
        %v1068 = vld [vmem:[%s117 + $0x9d8] sm:$0xff]
        %v1069 = vld [vmem:[%s117 + $0x9e0] sm:$0xff]
        %v1070 = vld [vmem:[%s117 + $0x9e8] sm:$0xff]
        %v1071 = vld [vmem:[%s117 + $0x9f0] sm:$0xff]
        %v1072 = vld [vmem:[%s117 + $0x9f8] sm:$0xff]
        %v1073 = vand.u32 2147483647, %v1065
        %v1074 = vand.u32 2147483647, %v1066
        %v1075 = vand.u32 2147483647, %v1067
        %v1076 = vand.u32 2147483647, %v1068
        %v1077 = vand.u32 2147483647, %v1069
        %v1078 = vand.u32 2147483647, %v1070
        %v1079 = vand.u32 2147483647, %v1071
        %v1080 = vand.u32 2147483647, %v1072
        %v1081 = vadd.f32 %v1057, %v1073
        %v1082 = vadd.f32 %v1058, %v1074
        %v1083 = vadd.f32 %v1059, %v1075
        %v1084 = vadd.f32 %v1060, %v1076
        %v1085 = vadd.f32 %v1061, %v1077
        %v1086 = vadd.f32 %v1062, %v1078
        %v1087 = vadd.f32 %v1063, %v1079
        %v1088 = vadd.f32 %v1064, %v1080
        %v1089 = vld [vmem:[%s117 + $0xa00] sm:$0xff]
        %v1090 = vld [vmem:[%s117 + $0xa08] sm:$0xff]
        %v1091 = vld [vmem:[%s117 + $0xa10] sm:$0xff]
        %v1092 = vld [vmem:[%s117 + $0xa18] sm:$0xff]
        %v1093 = vld [vmem:[%s117 + $0xa20] sm:$0xff]
        %v1094 = vld [vmem:[%s117 + $0xa28] sm:$0xff]
        %v1095 = vld [vmem:[%s117 + $0xa30] sm:$0xff]
        %v1096 = vld [vmem:[%s117 + $0xa38] sm:$0xff]
        %v1097 = vand.u32 2147483647, %v1089
        %v1098 = vand.u32 2147483647, %v1090
        %v1099 = vand.u32 2147483647, %v1091
        %v1100 = vand.u32 2147483647, %v1092
        %v1101 = vand.u32 2147483647, %v1093
        %v1102 = vand.u32 2147483647, %v1094
        %v1103 = vand.u32 2147483647, %v1095
        %v1104 = vand.u32 2147483647, %v1096
        %v1105 = vadd.f32 %v1081, %v1097
        %v1106 = vadd.f32 %v1082, %v1098
        %v1107 = vadd.f32 %v1083, %v1099
        %v1108 = vadd.f32 %v1084, %v1100
        %v1109 = vadd.f32 %v1085, %v1101
        %v1110 = vadd.f32 %v1086, %v1102
        %v1111 = vadd.f32 %v1087, %v1103
        %v1112 = vadd.f32 %v1088, %v1104
        %v1113 = vld [vmem:[%s117 + $0xa40] sm:$0xff]
        %v1114 = vld [vmem:[%s117 + $0xa48] sm:$0xff]
        %v1115 = vld [vmem:[%s117 + $0xa50] sm:$0xff]
        %v1116 = vld [vmem:[%s117 + $0xa58] sm:$0xff]
        %v1117 = vld [vmem:[%s117 + $0xa60] sm:$0xff]
        %v1118 = vld [vmem:[%s117 + $0xa68] sm:$0xff]
        %v1119 = vld [vmem:[%s117 + $0xa70] sm:$0xff]
        %v1120 = vld [vmem:[%s117 + $0xa78] sm:$0xff]
        %v1121 = vand.u32 2147483647, %v1113
        %v1122 = vand.u32 2147483647, %v1114
        %v1123 = vand.u32 2147483647, %v1115
        %v1124 = vand.u32 2147483647, %v1116
        %v1125 = vand.u32 2147483647, %v1117
        %v1126 = vand.u32 2147483647, %v1118
        %v1127 = vand.u32 2147483647, %v1119
        %v1128 = vand.u32 2147483647, %v1120
        %v1129 = vadd.f32 %v1105, %v1121
        %v1130 = vadd.f32 %v1106, %v1122
        %v1131 = vadd.f32 %v1107, %v1123
        %v1132 = vadd.f32 %v1108, %v1124
        %v1133 = vadd.f32 %v1109, %v1125
        %v1134 = vadd.f32 %v1110, %v1126
        %v1135 = vadd.f32 %v1111, %v1127
        %v1136 = vadd.f32 %v1112, %v1128
        %v1137 = vld [vmem:[%s117 + $0xa80] sm:$0xff]
        %v1138 = vld [vmem:[%s117 + $0xa88] sm:$0xff]
        %v1139 = vld [vmem:[%s117 + $0xa90] sm:$0xff]
        %v1140 = vld [vmem:[%s117 + $0xa98] sm:$0xff]
        %v1141 = vld [vmem:[%s117 + $0xaa0] sm:$0xff]
        %v1142 = vld [vmem:[%s117 + $0xaa8] sm:$0xff]
        %v1143 = vld [vmem:[%s117 + $0xab0] sm:$0xff]
        %v1144 = vld [vmem:[%s117 + $0xab8] sm:$0xff]
        %v1145 = vand.u32 2147483647, %v1137
        %v1146 = vand.u32 2147483647, %v1138
        %v1147 = vand.u32 2147483647, %v1139
        %v1148 = vand.u32 2147483647, %v1140
        %v1149 = vand.u32 2147483647, %v1141
        %v1150 = vand.u32 2147483647, %v1142
        %v1151 = vand.u32 2147483647, %v1143
        %v1152 = vand.u32 2147483647, %v1144
        %v1153 = vadd.f32 %v1129, %v1145
        %v1154 = vadd.f32 %v1130, %v1146
        %v1155 = vadd.f32 %v1131, %v1147
        %v1156 = vadd.f32 %v1132, %v1148
        %v1157 = vadd.f32 %v1133, %v1149
        %v1158 = vadd.f32 %v1134, %v1150
        %v1159 = vadd.f32 %v1135, %v1151
        %v1160 = vadd.f32 %v1136, %v1152
        %v1161 = vld [vmem:[%s117 + $0xac0] sm:$0xff]
        %v1162 = vld [vmem:[%s117 + $0xac8] sm:$0xff]
        %v1163 = vld [vmem:[%s117 + $0xad0] sm:$0xff]
        %v1164 = vld [vmem:[%s117 + $0xad8] sm:$0xff]
        %v1165 = vld [vmem:[%s117 + $0xae0] sm:$0xff]
        %v1166 = vld [vmem:[%s117 + $0xae8] sm:$0xff]
        %v1167 = vld [vmem:[%s117 + $0xaf0] sm:$0xff]
        %v1168 = vld [vmem:[%s117 + $0xaf8] sm:$0xff]
        %v1169 = vand.u32 2147483647, %v1161
        %v1170 = vand.u32 2147483647, %v1162
        %v1171 = vand.u32 2147483647, %v1163
        %v1172 = vand.u32 2147483647, %v1164
        %v1173 = vand.u32 2147483647, %v1165
        %v1174 = vand.u32 2147483647, %v1166
        %v1175 = vand.u32 2147483647, %v1167
        %v1176 = vand.u32 2147483647, %v1168
        %v1177 = vadd.f32 %v1153, %v1169
        %v1178 = vadd.f32 %v1154, %v1170
        %v1179 = vadd.f32 %v1155, %v1171
        %v1180 = vadd.f32 %v1156, %v1172
        %v1181 = vadd.f32 %v1157, %v1173
        %v1182 = vadd.f32 %v1158, %v1174
        %v1183 = vadd.f32 %v1159, %v1175
        %v1184 = vadd.f32 %v1160, %v1176
        %v1185 = vld [vmem:[%s117 + $0xb00] sm:$0xff]
        %v1186 = vld [vmem:[%s117 + $0xb08] sm:$0xff]
        %v1187 = vld [vmem:[%s117 + $0xb10] sm:$0xff]
        %v1188 = vld [vmem:[%s117 + $0xb18] sm:$0xff]
        %v1189 = vld [vmem:[%s117 + $0xb20] sm:$0xff]
        %v1190 = vld [vmem:[%s117 + $0xb28] sm:$0xff]
        %v1191 = vld [vmem:[%s117 + $0xb30] sm:$0xff]
        %v1192 = vld [vmem:[%s117 + $0xb38] sm:$0xff]
        %v1193 = vand.u32 2147483647, %v1185
        %v1194 = vand.u32 2147483647, %v1186
        %v1195 = vand.u32 2147483647, %v1187
        %v1196 = vand.u32 2147483647, %v1188
        %v1197 = vand.u32 2147483647, %v1189
        %v1198 = vand.u32 2147483647, %v1190
        %v1199 = vand.u32 2147483647, %v1191
        %v1200 = vand.u32 2147483647, %v1192
        %v1201 = vadd.f32 %v1177, %v1193
        %v1202 = vadd.f32 %v1178, %v1194
        %v1203 = vadd.f32 %v1179, %v1195
        %v1204 = vadd.f32 %v1180, %v1196
        %v1205 = vadd.f32 %v1181, %v1197
        %v1206 = vadd.f32 %v1182, %v1198
        %v1207 = vadd.f32 %v1183, %v1199
        %v1208 = vadd.f32 %v1184, %v1200
        %v1209 = vld [vmem:[%s117 + $0xb40] sm:$0xff]
        %v1210 = vld [vmem:[%s117 + $0xb48] sm:$0xff]
        %v1211 = vld [vmem:[%s117 + $0xb50] sm:$0xff]
        %v1212 = vld [vmem:[%s117 + $0xb58] sm:$0xff]
        %v1213 = vld [vmem:[%s117 + $0xb60] sm:$0xff]
        %v1214 = vld [vmem:[%s117 + $0xb68] sm:$0xff]
        %v1215 = vld [vmem:[%s117 + $0xb70] sm:$0xff]
        %v1216 = vld [vmem:[%s117 + $0xb78] sm:$0xff]
        %v1217 = vand.u32 2147483647, %v1209
        %v1218 = vand.u32 2147483647, %v1210
        %v1219 = vand.u32 2147483647, %v1211
        %v1220 = vand.u32 2147483647, %v1212
        %v1221 = vand.u32 2147483647, %v1213
        %v1222 = vand.u32 2147483647, %v1214
        %v1223 = vand.u32 2147483647, %v1215
        %v1224 = vand.u32 2147483647, %v1216
        %v1225 = vadd.f32 %v1201, %v1217
        %v1226 = vadd.f32 %v1202, %v1218
        %v1227 = vadd.f32 %v1203, %v1219
        %v1228 = vadd.f32 %v1204, %v1220
        %v1229 = vadd.f32 %v1205, %v1221
        %v1230 = vadd.f32 %v1206, %v1222
        %v1231 = vadd.f32 %v1207, %v1223
        %v1232 = vadd.f32 %v1208, %v1224
        %v1233 = vld [vmem:[%s117 + $0xb80] sm:$0xff]
        %v1234 = vld [vmem:[%s117 + $0xb88] sm:$0xff]
        %v1235 = vld [vmem:[%s117 + $0xb90] sm:$0xff]
        %v1236 = vld [vmem:[%s117 + $0xb98] sm:$0xff]
        %v1237 = vld [vmem:[%s117 + $0xba0] sm:$0xff]
        %v1238 = vld [vmem:[%s117 + $0xba8] sm:$0xff]
        %v1239 = vld [vmem:[%s117 + $0xbb0] sm:$0xff]
        %v1240 = vld [vmem:[%s117 + $0xbb8] sm:$0xff]
        %v1241 = vand.u32 2147483647, %v1233
        %v1242 = vand.u32 2147483647, %v1234
        %v1243 = vand.u32 2147483647, %v1235
        %v1244 = vand.u32 2147483647, %v1236
        %v1245 = vand.u32 2147483647, %v1237
        %v1246 = vand.u32 2147483647, %v1238
        %v1247 = vand.u32 2147483647, %v1239
        %v1248 = vand.u32 2147483647, %v1240
        %v1249 = vadd.f32 %v1225, %v1241
        %v1250 = vadd.f32 %v1226, %v1242
        %v1251 = vadd.f32 %v1227, %v1243
        %v1252 = vadd.f32 %v1228, %v1244
        %v1253 = vadd.f32 %v1229, %v1245
        %v1254 = vadd.f32 %v1230, %v1246
        %v1255 = vadd.f32 %v1231, %v1247
        %v1256 = vadd.f32 %v1232, %v1248
        %v1257 = vld [vmem:[%s117 + $0xbc0] sm:$0xff]
        %v1258 = vld [vmem:[%s117 + $0xbc8] sm:$0xff]
        %v1259 = vld [vmem:[%s117 + $0xbd0] sm:$0xff]
        %v1260 = vld [vmem:[%s117 + $0xbd8] sm:$0xff]
        %v1261 = vld [vmem:[%s117 + $0xbe0] sm:$0xff]
        %v1262 = vld [vmem:[%s117 + $0xbe8] sm:$0xff]
        %v1263 = vld [vmem:[%s117 + $0xbf0] sm:$0xff]
        %v1264 = vld [vmem:[%s117 + $0xbf8] sm:$0xff]
        %v1265 = vand.u32 2147483647, %v1257
        %v1266 = vand.u32 2147483647, %v1258
        %v1267 = vand.u32 2147483647, %v1259
        %v1268 = vand.u32 2147483647, %v1260
        %v1269 = vand.u32 2147483647, %v1261
        %v1270 = vand.u32 2147483647, %v1262
        %v1271 = vand.u32 2147483647, %v1263
        %v1272 = vand.u32 2147483647, %v1264
        %v1273 = vadd.f32 %v1249, %v1265
        %v1274 = vadd.f32 %v1250, %v1266
        %v1275 = vadd.f32 %v1251, %v1267
        %v1276 = vadd.f32 %v1252, %v1268
        %v1277 = vadd.f32 %v1253, %v1269
        %v1278 = vadd.f32 %v1254, %v1270
        %v1279 = vadd.f32 %v1255, %v1271
        %v1280 = vadd.f32 %v1256, %v1272
        %v1281 = vld [vmem:[%s117 + $0xc00] sm:$0xff]
        %v1282 = vld [vmem:[%s117 + $0xc08] sm:$0xff]
        %v1283 = vld [vmem:[%s117 + $0xc10] sm:$0xff]
        %v1284 = vld [vmem:[%s117 + $0xc18] sm:$0xff]
        %v1285 = vld [vmem:[%s117 + $0xc20] sm:$0xff]
        %v1286 = vld [vmem:[%s117 + $0xc28] sm:$0xff]
        %v1287 = vld [vmem:[%s117 + $0xc30] sm:$0xff]
        %v1288 = vld [vmem:[%s117 + $0xc38] sm:$0xff]
        %v1289 = vand.u32 2147483647, %v1281
        %v1290 = vand.u32 2147483647, %v1282
        %v1291 = vand.u32 2147483647, %v1283
        %v1292 = vand.u32 2147483647, %v1284
        %v1293 = vand.u32 2147483647, %v1285
        %v1294 = vand.u32 2147483647, %v1286
        %v1295 = vand.u32 2147483647, %v1287
        %v1296 = vand.u32 2147483647, %v1288
        %v1297 = vadd.f32 %v1273, %v1289
        %v1298 = vadd.f32 %v1274, %v1290
        %v1299 = vadd.f32 %v1275, %v1291
        %v1300 = vadd.f32 %v1276, %v1292
        %v1301 = vadd.f32 %v1277, %v1293
        %v1302 = vadd.f32 %v1278, %v1294
        %v1303 = vadd.f32 %v1279, %v1295
        %v1304 = vadd.f32 %v1280, %v1296
        %v1305 = vld [vmem:[%s117 + $0xc40] sm:$0xff]
        %v1306 = vld [vmem:[%s117 + $0xc48] sm:$0xff]
        %v1307 = vld [vmem:[%s117 + $0xc50] sm:$0xff]
        %v1308 = vld [vmem:[%s117 + $0xc58] sm:$0xff]
        %v1309 = vld [vmem:[%s117 + $0xc60] sm:$0xff]
        %v1310 = vld [vmem:[%s117 + $0xc68] sm:$0xff]
        %v1311 = vld [vmem:[%s117 + $0xc70] sm:$0xff]
        %v1312 = vld [vmem:[%s117 + $0xc78] sm:$0xff]
        %v1313 = vand.u32 2147483647, %v1305
        %v1314 = vand.u32 2147483647, %v1306
        %v1315 = vand.u32 2147483647, %v1307
        %v1316 = vand.u32 2147483647, %v1308
        %v1317 = vand.u32 2147483647, %v1309
        %v1318 = vand.u32 2147483647, %v1310
        %v1319 = vand.u32 2147483647, %v1311
        %v1320 = vand.u32 2147483647, %v1312
        %v1321 = vadd.f32 %v1297, %v1313
        %v1322 = vadd.f32 %v1298, %v1314
        %v1323 = vadd.f32 %v1299, %v1315
        %v1324 = vadd.f32 %v1300, %v1316
        %v1325 = vadd.f32 %v1301, %v1317
        %v1326 = vadd.f32 %v1302, %v1318
        %v1327 = vadd.f32 %v1303, %v1319
        %v1328 = vadd.f32 %v1304, %v1320
        %v1329 = vld [vmem:[%s117 + $0xc80] sm:$0xff]
        %v1330 = vld [vmem:[%s117 + $0xc88] sm:$0xff]
        %v1331 = vld [vmem:[%s117 + $0xc90] sm:$0xff]
        %v1332 = vld [vmem:[%s117 + $0xc98] sm:$0xff]
        %v1333 = vld [vmem:[%s117 + $0xca0] sm:$0xff]
        %v1334 = vld [vmem:[%s117 + $0xca8] sm:$0xff]
        %v1335 = vld [vmem:[%s117 + $0xcb0] sm:$0xff]
        %v1336 = vld [vmem:[%s117 + $0xcb8] sm:$0xff]
        %v1337 = vand.u32 2147483647, %v1329
        %v1338 = vand.u32 2147483647, %v1330
        %v1339 = vand.u32 2147483647, %v1331
        %v1340 = vand.u32 2147483647, %v1332
        %v1341 = vand.u32 2147483647, %v1333
        %v1342 = vand.u32 2147483647, %v1334
        %v1343 = vand.u32 2147483647, %v1335
        %v1344 = vand.u32 2147483647, %v1336
        %v1345 = vadd.f32 %v1321, %v1337
        %v1346 = vadd.f32 %v1322, %v1338
        %v1347 = vadd.f32 %v1323, %v1339
        %v1348 = vadd.f32 %v1324, %v1340
        %v1349 = vadd.f32 %v1325, %v1341
        %v1350 = vadd.f32 %v1326, %v1342
        %v1351 = vadd.f32 %v1327, %v1343
        %v1352 = vadd.f32 %v1328, %v1344
        %v1353 = vld [vmem:[%s117 + $0xcc0] sm:$0xff]
        %v1354 = vld [vmem:[%s117 + $0xcc8] sm:$0xff]
        %v1355 = vld [vmem:[%s117 + $0xcd0] sm:$0xff]
        %v1356 = vld [vmem:[%s117 + $0xcd8] sm:$0xff]
        %v1357 = vld [vmem:[%s117 + $0xce0] sm:$0xff]
        %v1358 = vld [vmem:[%s117 + $0xce8] sm:$0xff]
        %v1359 = vld [vmem:[%s117 + $0xcf0] sm:$0xff]
        %v1360 = vld [vmem:[%s117 + $0xcf8] sm:$0xff]
        %v1361 = vand.u32 2147483647, %v1353
        %v1362 = vand.u32 2147483647, %v1354
        %v1363 = vand.u32 2147483647, %v1355
        %v1364 = vand.u32 2147483647, %v1356
        %v1365 = vand.u32 2147483647, %v1357
        %v1366 = vand.u32 2147483647, %v1358
        %v1367 = vand.u32 2147483647, %v1359
        %v1368 = vand.u32 2147483647, %v1360
        %v1369 = vadd.f32 %v1345, %v1361
        %v1370 = vadd.f32 %v1346, %v1362
        %v1371 = vadd.f32 %v1347, %v1363
        %v1372 = vadd.f32 %v1348, %v1364
        %v1373 = vadd.f32 %v1349, %v1365
        %v1374 = vadd.f32 %v1350, %v1366
        %v1375 = vadd.f32 %v1351, %v1367
        %v1376 = vadd.f32 %v1352, %v1368
        %v1377 = vld [vmem:[%s117 + $0xd00] sm:$0xff]
        %v1378 = vld [vmem:[%s117 + $0xd08] sm:$0xff]
        %v1379 = vld [vmem:[%s117 + $0xd10] sm:$0xff]
        %v1380 = vld [vmem:[%s117 + $0xd18] sm:$0xff]
        %v1381 = vld [vmem:[%s117 + $0xd20] sm:$0xff]
        %v1382 = vld [vmem:[%s117 + $0xd28] sm:$0xff]
        %v1383 = vld [vmem:[%s117 + $0xd30] sm:$0xff]
        %v1384 = vld [vmem:[%s117 + $0xd38] sm:$0xff]
        %v1385 = vand.u32 2147483647, %v1377
        %v1386 = vand.u32 2147483647, %v1378
        %v1387 = vand.u32 2147483647, %v1379
        %v1388 = vand.u32 2147483647, %v1380
        %v1389 = vand.u32 2147483647, %v1381
        %v1390 = vand.u32 2147483647, %v1382
        %v1391 = vand.u32 2147483647, %v1383
        %v1392 = vand.u32 2147483647, %v1384
        %v1393 = vadd.f32 %v1369, %v1385
        %v1394 = vadd.f32 %v1370, %v1386
        %v1395 = vadd.f32 %v1371, %v1387
        %v1396 = vadd.f32 %v1372, %v1388
        %v1397 = vadd.f32 %v1373, %v1389
        %v1398 = vadd.f32 %v1374, %v1390
        %v1399 = vadd.f32 %v1375, %v1391
        %v1400 = vadd.f32 %v1376, %v1392
        %v1401 = vld [vmem:[%s117 + $0xd40] sm:$0xff]
        %v1402 = vld [vmem:[%s117 + $0xd48] sm:$0xff]
        %v1403 = vld [vmem:[%s117 + $0xd50] sm:$0xff]
        %v1404 = vld [vmem:[%s117 + $0xd58] sm:$0xff]
        %v1405 = vld [vmem:[%s117 + $0xd60] sm:$0xff]
        %v1406 = vld [vmem:[%s117 + $0xd68] sm:$0xff]
        %v1407 = vld [vmem:[%s117 + $0xd70] sm:$0xff]
        %v1408 = vld [vmem:[%s117 + $0xd78] sm:$0xff]
        %v1409 = vand.u32 2147483647, %v1401
        %v1410 = vand.u32 2147483647, %v1402
        %v1411 = vand.u32 2147483647, %v1403
        %v1412 = vand.u32 2147483647, %v1404
        %v1413 = vand.u32 2147483647, %v1405
        %v1414 = vand.u32 2147483647, %v1406
        %v1415 = vand.u32 2147483647, %v1407
        %v1416 = vand.u32 2147483647, %v1408
        %v1417 = vadd.f32 %v1393, %v1409
        %v1418 = vadd.f32 %v1394, %v1410
        %v1419 = vadd.f32 %v1395, %v1411
        %v1420 = vadd.f32 %v1396, %v1412
        %v1421 = vadd.f32 %v1397, %v1413
        %v1422 = vadd.f32 %v1398, %v1414
        %v1423 = vadd.f32 %v1399, %v1415
        %v1424 = vadd.f32 %v1400, %v1416
        %v1425 = vld [vmem:[%s117 + $0xd80] sm:$0xff]
        %v1426 = vld [vmem:[%s117 + $0xd88] sm:$0xff]
        %v1427 = vld [vmem:[%s117 + $0xd90] sm:$0xff]
        %v1428 = vld [vmem:[%s117 + $0xd98] sm:$0xff]
        %v1429 = vld [vmem:[%s117 + $0xda0] sm:$0xff]
        %v1430 = vld [vmem:[%s117 + $0xda8] sm:$0xff]
        %v1431 = vld [vmem:[%s117 + $0xdb0] sm:$0xff]
        %v1432 = vld [vmem:[%s117 + $0xdb8] sm:$0xff]
        %v1433 = vand.u32 2147483647, %v1425
        %v1434 = vand.u32 2147483647, %v1426
        %v1435 = vand.u32 2147483647, %v1427
        %v1436 = vand.u32 2147483647, %v1428
        %v1437 = vand.u32 2147483647, %v1429
        %v1438 = vand.u32 2147483647, %v1430
        %v1439 = vand.u32 2147483647, %v1431
        %v1440 = vand.u32 2147483647, %v1432
        %v1441 = vadd.f32 %v1417, %v1433
        %v1442 = vadd.f32 %v1418, %v1434
        %v1443 = vadd.f32 %v1419, %v1435
        %v1444 = vadd.f32 %v1420, %v1436
        %v1445 = vadd.f32 %v1421, %v1437
        %v1446 = vadd.f32 %v1422, %v1438
        %v1447 = vadd.f32 %v1423, %v1439
        %v1448 = vadd.f32 %v1424, %v1440
        %v1449 = vld [vmem:[%s117 + $0xdc0] sm:$0xff]
        %v1450 = vld [vmem:[%s117 + $0xdc8] sm:$0xff]
        %v1451 = vld [vmem:[%s117 + $0xdd0] sm:$0xff]
        %v1452 = vld [vmem:[%s117 + $0xdd8] sm:$0xff]
        %v1453 = vld [vmem:[%s117 + $0xde0] sm:$0xff]
        %v1454 = vld [vmem:[%s117 + $0xde8] sm:$0xff]
        %v1455 = vld [vmem:[%s117 + $0xdf0] sm:$0xff]
        %v1456 = vld [vmem:[%s117 + $0xdf8] sm:$0xff]
        %v1457 = vand.u32 2147483647, %v1449
        %v1458 = vand.u32 2147483647, %v1450
        %v1459 = vand.u32 2147483647, %v1451
        %v1460 = vand.u32 2147483647, %v1452
        %v1461 = vand.u32 2147483647, %v1453
        %v1462 = vand.u32 2147483647, %v1454
        %v1463 = vand.u32 2147483647, %v1455
        %v1464 = vand.u32 2147483647, %v1456
        %v1465 = vadd.f32 %v1441, %v1457
        %v1466 = vadd.f32 %v1442, %v1458
        %v1467 = vadd.f32 %v1443, %v1459
        %v1468 = vadd.f32 %v1444, %v1460
        %v1469 = vadd.f32 %v1445, %v1461
        %v1470 = vadd.f32 %v1446, %v1462
        %v1471 = vadd.f32 %v1447, %v1463
        %v1472 = vadd.f32 %v1448, %v1464
        %v1473 = vld [vmem:[%s117 + $0xe00] sm:$0xff]
        %v1474 = vld [vmem:[%s117 + $0xe08] sm:$0xff]
        %v1475 = vld [vmem:[%s117 + $0xe10] sm:$0xff]
        %v1476 = vld [vmem:[%s117 + $0xe18] sm:$0xff]
        %v1477 = vld [vmem:[%s117 + $0xe20] sm:$0xff]
        %v1478 = vld [vmem:[%s117 + $0xe28] sm:$0xff]
        %v1479 = vld [vmem:[%s117 + $0xe30] sm:$0xff]
        %v1480 = vld [vmem:[%s117 + $0xe38] sm:$0xff]
        %v1481 = vand.u32 2147483647, %v1473
        %v1482 = vand.u32 2147483647, %v1474
        %v1483 = vand.u32 2147483647, %v1475
        %v1484 = vand.u32 2147483647, %v1476
        %v1485 = vand.u32 2147483647, %v1477
        %v1486 = vand.u32 2147483647, %v1478
        %v1487 = vand.u32 2147483647, %v1479
        %v1488 = vand.u32 2147483647, %v1480
        %v1489 = vadd.f32 %v1465, %v1481
        %v1490 = vadd.f32 %v1466, %v1482
        %v1491 = vadd.f32 %v1467, %v1483
        %v1492 = vadd.f32 %v1468, %v1484
        %v1493 = vadd.f32 %v1469, %v1485
        %v1494 = vadd.f32 %v1470, %v1486
        %v1495 = vadd.f32 %v1471, %v1487
        %v1496 = vadd.f32 %v1472, %v1488
        %v1497 = vld [vmem:[%s117 + $0xe40] sm:$0xff]
        %v1498 = vld [vmem:[%s117 + $0xe48] sm:$0xff]
        %v1499 = vld [vmem:[%s117 + $0xe50] sm:$0xff]
        %v1500 = vld [vmem:[%s117 + $0xe58] sm:$0xff]
        %v1501 = vld [vmem:[%s117 + $0xe60] sm:$0xff]
        %v1502 = vld [vmem:[%s117 + $0xe68] sm:$0xff]
        %v1503 = vld [vmem:[%s117 + $0xe70] sm:$0xff]
        %v1504 = vld [vmem:[%s117 + $0xe78] sm:$0xff]
        %v1505 = vand.u32 2147483647, %v1497
        %v1506 = vand.u32 2147483647, %v1498
        %v1507 = vand.u32 2147483647, %v1499
        %v1508 = vand.u32 2147483647, %v1500
        %v1509 = vand.u32 2147483647, %v1501
        %v1510 = vand.u32 2147483647, %v1502
        %v1511 = vand.u32 2147483647, %v1503
        %v1512 = vand.u32 2147483647, %v1504
        %v1513 = vadd.f32 %v1489, %v1505
        %v1514 = vadd.f32 %v1490, %v1506
        %v1515 = vadd.f32 %v1491, %v1507
        %v1516 = vadd.f32 %v1492, %v1508
        %v1517 = vadd.f32 %v1493, %v1509
        %v1518 = vadd.f32 %v1494, %v1510
        %v1519 = vadd.f32 %v1495, %v1511
        %v1520 = vadd.f32 %v1496, %v1512
        %v1521 = vld [vmem:[%s117 + $0xe80] sm:$0xff]
        %v1522 = vld [vmem:[%s117 + $0xe88] sm:$0xff]
        %v1523 = vld [vmem:[%s117 + $0xe90] sm:$0xff]
        %v1524 = vld [vmem:[%s117 + $0xe98] sm:$0xff]
        %v1525 = vld [vmem:[%s117 + $0xea0] sm:$0xff]
        %v1526 = vld [vmem:[%s117 + $0xea8] sm:$0xff]
        %v1527 = vld [vmem:[%s117 + $0xeb0] sm:$0xff]
        %v1528 = vld [vmem:[%s117 + $0xeb8] sm:$0xff]
        %v1529 = vand.u32 2147483647, %v1521
        %v1530 = vand.u32 2147483647, %v1522
        %v1531 = vand.u32 2147483647, %v1523
        %v1532 = vand.u32 2147483647, %v1524
        %v1533 = vand.u32 2147483647, %v1525
        %v1534 = vand.u32 2147483647, %v1526
        %v1535 = vand.u32 2147483647, %v1527
        %v1536 = vand.u32 2147483647, %v1528
        %v1537 = vadd.f32 %v1513, %v1529
        %v1538 = vadd.f32 %v1514, %v1530
        %v1539 = vadd.f32 %v1515, %v1531
        %v1540 = vadd.f32 %v1516, %v1532
        %v1541 = vadd.f32 %v1517, %v1533
        %v1542 = vadd.f32 %v1518, %v1534
        %v1543 = vadd.f32 %v1519, %v1535
        %v1544 = vadd.f32 %v1520, %v1536
        %v1545 = vld [vmem:[%s117 + $0xec0] sm:$0xff]
        %v1546 = vld [vmem:[%s117 + $0xec8] sm:$0xff]
        %v1547 = vld [vmem:[%s117 + $0xed0] sm:$0xff]
        %v1548 = vld [vmem:[%s117 + $0xed8] sm:$0xff]
        %v1549 = vld [vmem:[%s117 + $0xee0] sm:$0xff]
        %v1550 = vld [vmem:[%s117 + $0xee8] sm:$0xff]
        %v1551 = vld [vmem:[%s117 + $0xef0] sm:$0xff]
        %v1552 = vld [vmem:[%s117 + $0xef8] sm:$0xff]
        %v1553 = vand.u32 2147483647, %v1545
        %v1554 = vand.u32 2147483647, %v1546
        %v1555 = vand.u32 2147483647, %v1547
        %v1556 = vand.u32 2147483647, %v1548
        %v1557 = vand.u32 2147483647, %v1549
        %v1558 = vand.u32 2147483647, %v1550
        %v1559 = vand.u32 2147483647, %v1551
        %v1560 = vand.u32 2147483647, %v1552
        %v1561 = vadd.f32 %v1537, %v1553
        %v1562 = vadd.f32 %v1538, %v1554
        %v1563 = vadd.f32 %v1539, %v1555
        %v1564 = vadd.f32 %v1540, %v1556
        %v1565 = vadd.f32 %v1541, %v1557
        %v1566 = vadd.f32 %v1542, %v1558
        %v1567 = vadd.f32 %v1543, %v1559
        %v1568 = vadd.f32 %v1544, %v1560
        %v1569 = vld [vmem:[%s117 + $0xf00] sm:$0xff]
        %v1570 = vld [vmem:[%s117 + $0xf08] sm:$0xff]
        %v1571 = vld [vmem:[%s117 + $0xf10] sm:$0xff]
        %v1572 = vld [vmem:[%s117 + $0xf18] sm:$0xff]
        %v1573 = vld [vmem:[%s117 + $0xf20] sm:$0xff]
        %v1574 = vld [vmem:[%s117 + $0xf28] sm:$0xff]
        %v1575 = vld [vmem:[%s117 + $0xf30] sm:$0xff]
        %v1576 = vld [vmem:[%s117 + $0xf38] sm:$0xff]
        %v1577 = vand.u32 2147483647, %v1569
        %v1578 = vand.u32 2147483647, %v1570
        %v1579 = vand.u32 2147483647, %v1571
        %v1580 = vand.u32 2147483647, %v1572
        %v1581 = vand.u32 2147483647, %v1573
        %v1582 = vand.u32 2147483647, %v1574
        %v1583 = vand.u32 2147483647, %v1575
        %v1584 = vand.u32 2147483647, %v1576
        %v1585 = vadd.f32 %v1561, %v1577
        %v1586 = vadd.f32 %v1562, %v1578
        %v1587 = vadd.f32 %v1563, %v1579
        %v1588 = vadd.f32 %v1564, %v1580
        %v1589 = vadd.f32 %v1565, %v1581
        %v1590 = vadd.f32 %v1566, %v1582
        %v1591 = vadd.f32 %v1567, %v1583
        %v1592 = vadd.f32 %v1568, %v1584
        %v1593 = vld [vmem:[%s117 + $0xf40] sm:$0xff]
        %v1594 = vld [vmem:[%s117 + $0xf48] sm:$0xff]
        %v1595 = vld [vmem:[%s117 + $0xf50] sm:$0xff]
        %v1596 = vld [vmem:[%s117 + $0xf58] sm:$0xff]
        %v1597 = vld [vmem:[%s117 + $0xf60] sm:$0xff]
        %v1598 = vld [vmem:[%s117 + $0xf68] sm:$0xff]
        %v1599 = vld [vmem:[%s117 + $0xf70] sm:$0xff]
        %v1600 = vld [vmem:[%s117 + $0xf78] sm:$0xff]
        %v1601 = vand.u32 2147483647, %v1593
        %v1602 = vand.u32 2147483647, %v1594
        %v1603 = vand.u32 2147483647, %v1595
        %v1604 = vand.u32 2147483647, %v1596
        %v1605 = vand.u32 2147483647, %v1597
        %v1606 = vand.u32 2147483647, %v1598
        %v1607 = vand.u32 2147483647, %v1599
        %v1608 = vand.u32 2147483647, %v1600
        %v1609 = vadd.f32 %v1585, %v1601
        %v1610 = vadd.f32 %v1586, %v1602
        %v1611 = vadd.f32 %v1587, %v1603
        %v1612 = vadd.f32 %v1588, %v1604
        %v1613 = vadd.f32 %v1589, %v1605
        %v1614 = vadd.f32 %v1590, %v1606
        %v1615 = vadd.f32 %v1591, %v1607
        %v1616 = vadd.f32 %v1592, %v1608
        %v1617 = vld [vmem:[%s117 + $0xf80] sm:$0xff]
        %v1618 = vld [vmem:[%s117 + $0xf88] sm:$0xff]
        %v1619 = vld [vmem:[%s117 + $0xf90] sm:$0xff]
        %v1620 = vld [vmem:[%s117 + $0xf98] sm:$0xff]
        %v1621 = vld [vmem:[%s117 + $0xfa0] sm:$0xff]
        %v1622 = vld [vmem:[%s117 + $0xfa8] sm:$0xff]
        %v1623 = vld [vmem:[%s117 + $0xfb0] sm:$0xff]
        %v1624 = vld [vmem:[%s117 + $0xfb8] sm:$0xff]
        %v1625 = vand.u32 2147483647, %v1617
        %v1626 = vand.u32 2147483647, %v1618
        %v1627 = vand.u32 2147483647, %v1619
        %v1628 = vand.u32 2147483647, %v1620
        %v1629 = vand.u32 2147483647, %v1621
        %v1630 = vand.u32 2147483647, %v1622
        %v1631 = vand.u32 2147483647, %v1623
        %v1632 = vand.u32 2147483647, %v1624
        %v1633 = vadd.f32 %v1609, %v1625
        %v1634 = vadd.f32 %v1610, %v1626
        %v1635 = vadd.f32 %v1611, %v1627
        %v1636 = vadd.f32 %v1612, %v1628
        %v1637 = vadd.f32 %v1613, %v1629
        %v1638 = vadd.f32 %v1614, %v1630
        %v1639 = vadd.f32 %v1615, %v1631
        %v1640 = vadd.f32 %v1616, %v1632
        %v1641 = vld [vmem:[%s117 + $0xfc0] sm:$0xff]
        %v1642 = vld [vmem:[%s117 + $0xfc8] sm:$0xff]
        %v1643 = vld [vmem:[%s117 + $0xfd0] sm:$0xff]
        %v1644 = vld [vmem:[%s117 + $0xfd8] sm:$0xff]
        %v1645 = vld [vmem:[%s117 + $0xfe0] sm:$0xff]
        %v1646 = vld [vmem:[%s117 + $0xfe8] sm:$0xff]
        %v1647 = vld [vmem:[%s117 + $0xff0] sm:$0xff]
        %v1648 = vld [vmem:[%s117 + $0xff8] sm:$0xff]
        %v1649 = vand.u32 2147483647, %v1641
        %v1650 = vand.u32 2147483647, %v1642
        %v1651 = vand.u32 2147483647, %v1643
        %v1652 = vand.u32 2147483647, %v1644
        %v1653 = vand.u32 2147483647, %v1645
        %v1654 = vand.u32 2147483647, %v1646
        %v1655 = vand.u32 2147483647, %v1647
        %v1656 = vand.u32 2147483647, %v1648
        %v1657 = vadd.f32 %v1633, %v1649
        %v1658 = vadd.f32 %v1634, %v1650
        %v1659 = vadd.f32 %v1635, %v1651
        %v1660 = vadd.f32 %v1636, %v1652
        %v1661 = vadd.f32 %v1637, %v1653
        %v1662 = vadd.f32 %v1638, %v1654
        %v1663 = vadd.f32 %v1639, %v1655
        %v1664 = vadd.f32 %v1640, %v1656
        %1665 = vst [vmem:[%s135] sm:$0xff] %v1657
        %1666 = vst [vmem:[%s135 + $0x8] sm:$0xff] %v1658
        %1667 = vst [vmem:[%s135 + $0x10] sm:$0xff] %v1659
        %1668 = vst [vmem:[%s135 + $0x18] sm:$0xff] %v1660
        %1669 = vst [vmem:[%s135 + $0x20] sm:$0xff] %v1661
        %1670 = vst [vmem:[%s135 + $0x28] sm:$0xff] %v1662
        %1671 = vst [vmem:[%s135 + $0x30] sm:$0xff] %v1663
        %1672 = vst [vmem:[%s135 + $0x38] sm:$0xff] %v1664
        %s1673 = sand.u32 %s52, 1
        %s1674 = scalar_lea.sflag [#allocation4], %s1673
        %s1675 = sand.u32 %s52, 1
        %s1676 = smul.addr %s1675, 64
        %s1677 = scalar_lea.vmem [#allocation5], %s1676
        // Predicated region
        $region29: #{tpu_custom_call.1} parent=23 // pred_check
          %p1678 = pneg %p62
        $region30: #{tpu_custom_call.1} parent=23 // pred_check_branch
          %1680 = sbr.rel (%p1678) target = $region32
        $region31: #{tpu_custom_call.1} parent=23 // pred_region
          %s1682 = ssub.s32 1024, 1024
          %1683 = vsyncadd %s1674, %s1682
          %s1684 = smul.addr %s18, 8
          %s1685 = smul.addr %s1684, 128
          %s1686 = scalar_lea.hbm %s1, %s1685
          %s1688 = sshll.u32 %s1677, 4
          %s1689 = int_to_ptr.vmem [resolvable:$true] %s1688
          %1691 = dma.vmem_to_hbm [thread:$0]  %s1689, 1024, %s1686, %s1674
        $region32: #{tpu_custom_call.1} parent=23 // pred_fallthru
          _
      $region24: #{tpu_custom_call.1} parent=5 // pred_fallthru
        _
      %p1692 = scmp.le.s32.totalorder 2, %s13
      // Predicated region
      $region33: #{tpu_custom_call.1} parent=5 // pred_check
        %p1693 = pneg %p1692
      $region34: #{tpu_custom_call.1} parent=5 // pred_check_branch
        %1695 = sbr.rel (%p1693) target = $region36
      $region35: #{tpu_custom_call.1} parent=5 // pred_region
        %s1696 = ssub.s32 %s13, 2
        // Predicated region
        $region37: #{tpu_custom_call.1} parent=35 // pred_check
          %p1697 = pneg %p68
        $region38: #{tpu_custom_call.1} parent=35 // pred_check_branch
          %1699 = sbr.rel (%p1697) target = $region40
        $region39: #{tpu_custom_call.1} parent=35 // pred_region
          %s1700 = sand.u32 %s53, 1
          %s1701 = scalar_lea.sflag [#allocation4], %s1700
          %s1702 = sand.u32 %s53, 1
          %s1703 = smul.addr %s1702, 64
          %s1704 = scalar_lea.vmem [#allocation5], %s1703
          %1705 = dma.done %s1701, 1024
        $region40: #{tpu_custom_call.1} parent=35 // pred_fallthru
          _
      $region36: #{tpu_custom_call.1} parent=5 // pred_fallthru
        _
    $region6: #{tpu_custom_call.1} parent=1 // loop_footer
      %s17 = sadd.s32 1, %s13
    $region7: #{tpu_custom_call.1} parent=1 // loop_footer_branch
      %12 = sbr.rel target = $region3
    $region8: #{tpu_custom_call.1} parent=1 // loop_exit
      _
    %1706 = vsyncpa [#allocation3], 1
    %s1707 = scalar_lea.sflag [#allocation3], 1
    %1708 = vsyncpa %s1707, 1
    %1709 = vsyncpa [#allocation4], 1
    %s1710 = scalar_lea.sflag [#allocation4], 1
    %1711 = vsyncpa %s1710, 1

</llo_original>
